<compile_context>
chip_gen: v7x
topology: tpu7x:2x2x1
jax: 0.10.0
libtpu: 0.0.40
codegen_flags: <defaults>
</compile_context>

<pallas_src>
import functools

import jax
import jax.numpy as jnp
from jax import lax
from jax.experimental import pallas as pl
from jax.experimental.pallas import tpu as pltpu


def _self_attn_kernel(x_ref, wq_ref, bq_ref, wk_ref, bk_ref, wv_ref, bv_ref,
                      gamma_ref, out_ref, *, tb, w):
    # x block: (C, TB*W) bf16, lane-dense.
    x_bf = x_ref[...]
    x_f32 = x_bf.astype(jnp.float32)

    # 1x1 Conv1d == channel-mixing matmul: bf16 operands, f32 accumulation.
    q = jnp.dot(wq_ref[...], x_bf, preferred_element_type=jnp.float32) + bq_ref[...]  # (C8, TB*W)
    k = jnp.dot(wk_ref[...], x_bf, preferred_element_type=jnp.float32) + bk_ref[...]  # (C8, TB*W)
    v = jnp.dot(wv_ref[...], x_bf, preferred_element_type=jnp.float32) + bv_ref[...]  # (C,  TB*W)

    # One hoisted transpose for the whole tile (instead of one per batch
    # element); the per-sample energy dots then run in standard orientation.
    q_t = q.T                                                      # (TB*W, C8)

    outs = []
    for b in range(tb):
        cols = slice(b * w, (b + 1) * w)
        qb = q_t[cols, :]                                          # (W, C8)
        kb = k[:, cols]                                            # (C8, W)
        vb = v[:, cols]                                            # (C,  W)

        # energy[i, j] = sum_c q[c, i] * k[c, j]
        energy = jnp.dot(qb, kb, preferred_element_type=jnp.float32)   # (W, W)
        energy = energy - jnp.max(energy, axis=-1, keepdims=True)
        p = jnp.exp(energy)
        # softmax denominator via EUP approx reciprocal -> VPU multiply.
        attn = p * pl.reciprocal(jnp.sum(p, axis=-1, keepdims=True), approx=True)

        # out[c, i] = sum_j v[c, j] * attn[i, j]  (contract last axes; the rhs
        # orientation is folded into the MXU, no attn.T materialization).
        outs.append(
            lax.dot_general(vb, attn, (((1,), (1,)), ((), ())),
                            preferred_element_type=jnp.float32))        # (C, W)

    o = jnp.concatenate(outs, axis=1)                              # (C, TB*W)
    # gamma from SMEM (scalar path); one full-width lane-dense store.
    out_ref[...] = gamma_ref[0, 0] * o + x_f32


def _pick_batch_tile(batch, width):
    """Per-step batch tile: prefer TB with TB*width a multiple of 128 lanes
    while keeping >= 2 grid steps (megacore); fall back to the whole batch."""
    divisors = [d for d in range(1, batch + 1) if batch % d == 0]
    lane_dense = [d for d in divisors if (d * width) % 128 == 0]
    multi_step = [d for d in lane_dense if batch // d >= 2]
    if multi_step:
        return min(multi_step)
    if lane_dense:
        return min(lane_dense)
    return batch


def self_attn_pallas(x, wq, bq, wk, bk, wv, bv, gamma):
    """SAGAN Self_Attn forward. x: (B, C, W) float32 -> (B, C, W) float32."""
    B, C, W = x.shape
    C8 = wq.shape[0]
    TB = _pick_batch_tile(B, W)
    num_steps = B // TB
    N = TB * W

    # Layout plumbing + bf16 casts done ONCE in the wrapper (not per grid step):
    # x -> lane-dense (C, B*W) slab; MXU operands in bf16, f32 accumulation.
    x_slab = jnp.transpose(x, (1, 0, 2)).reshape(C, B * W).astype(jnp.bfloat16)
    wq_bf = wq.astype(jnp.bfloat16)
    wk_bf = wk.astype(jnp.bfloat16)
    wv_bf = wv.astype(jnp.bfloat16)
    bq2 = bq.reshape(C8, 1).astype(jnp.float32)
    bk2 = bk.reshape(C8, 1).astype(jnp.float32)
    bv2 = bv.reshape(C, 1).astype(jnp.float32)
    gamma2 = gamma.reshape(1, 1).astype(jnp.float32)

    kernel = functools.partial(_self_attn_kernel, tb=TB, w=W)

    out_slab = pl.pallas_call(
        kernel,
        out_shape=jax.ShapeDtypeStruct((C, B * W), jnp.float32),
        grid_spec=pltpu.PrefetchScalarGridSpec(
            num_scalar_prefetch=0,
            grid=(num_steps,),
            in_specs=[
                pl.BlockSpec((C, N), lambda g: (0, g)),             # x slab tile
                pl.BlockSpec((C8, C), lambda g: (0, 0)),            # wq (static)
                pl.BlockSpec((C8, 1), lambda g: (0, 0)),            # bq
                pl.BlockSpec((C8, C), lambda g: (0, 0)),            # wk
                pl.BlockSpec((C8, 1), lambda g: (0, 0)),            # bk
                pl.BlockSpec((C, C), lambda g: (0, 0)),             # wv
                pl.BlockSpec((C, 1), lambda g: (0, 0)),             # bv
                pl.BlockSpec(memory_space=pltpu.MemorySpace.SMEM),  # gamma scalar
            ],
            out_specs=pl.BlockSpec((C, N), lambda g: (0, g)),
        ),
        compiler_params=pltpu.CompilerParams(
            dimension_semantics=("parallel",)),
    )(x_slab, wq_bf, bq2, wk_bf, bk2, wv_bf, bv2, gamma2)

    # Back to the PyTorch (B, C, W) layout.
    return jnp.transpose(out_slab.reshape(C, B, W), (1, 0, 2))


def self_attn_ref(x, wq, bq, wk, bk, wv, bv, gamma):
    """Pure-JAX reference mirroring the PyTorch forward.

    Operands are rounded to bf16 exactly the way the kernel feeds the MXU
    (x and conv weights), with f32 math, so the comparison isolates the
    kernel's attention arithmetic.
    """
    f32 = jnp.float32
    hi = lax.Precision.HIGHEST
    xc = x.astype(jnp.bfloat16).astype(f32)
    wqc = wq.astype(jnp.bfloat16).astype(f32)
    wkc = wk.astype(jnp.bfloat16).astype(f32)
    wvc = wv.astype(jnp.bfloat16).astype(f32)
    q = jnp.einsum('oc,bcw->bow', wqc, xc, precision=hi) + bq[None, :, None]
    k = jnp.einsum('oc,bcw->bow', wkc, xc, precision=hi) + bk[None, :, None]
    v = jnp.einsum('oc,bcw->bow', wvc, xc, precision=hi) + bv[None, :, None]
    energy = jnp.einsum('bci,bcj->bij', q, k, precision=hi)
    attn = jax.nn.softmax(energy, axis=-1)
    out = jnp.einsum('bcj,bij->bci', v, attn, precision=hi)
    return gamma[0] * out + xc


if __name__ == "__main__":
    # in_dim=32 -> query/key channels = 32 // 8 = 4.  B=16 gives TB=8
    # (TB*W = 128 lanes) and a 2-step grid (keeps both v7x TensorCores busy).
    B, C, W = 16, 32, 16
    C8 = C // 8

    key = jax.random.PRNGKey(0)
    kx, kwq, kbq, kwk, kbk, kwv, kbv = jax.random.split(key, 7)

    x = jax.random.normal(kx, (B, C, W), dtype=jnp.float32)
    wq = jax.random.normal(kwq, (C8, C), dtype=jnp.float32) * 0.1
    bq = jax.random.normal(kbq, (C8,), dtype=jnp.float32) * 0.1
    wk = jax.random.normal(kwk, (C8, C), dtype=jnp.float32) * 0.1
    bk = jax.random.normal(kbk, (C8,), dtype=jnp.float32) * 0.1
    wv = jax.random.normal(kwv, (C, C), dtype=jnp.float32) * 0.1
    bv = jax.random.normal(kbv, (C,), dtype=jnp.float32) * 0.1
    # PyTorch initializes gamma to zeros; use a nonzero value so the attention
    # path is actually exercised/verified.
    gamma = jnp.array([0.5], dtype=jnp.float32)

    out = self_attn_pallas(x, wq, bq, wk, bk, wv, bv, gamma)
    out = jax.block_until_ready(out)

    ref = self_attn_ref(x, wq, bq, wk, bk, wv, bv, gamma)
    assert out.shape == (B, C, W)
    max_err = jnp.max(jnp.abs(out - ref))
    assert jnp.allclose(out, ref, atol=5e-3, rtol=5e-3), (
        f"mismatch vs reference (max abs err {max_err})")

    print("KERNEL_OK")
</pallas_src>

<mosaic_0001>
module attributes {stable_mosaic.version = 11 : i64} {
  func.func @_self_attn_kernel(%arg0: i32, %arg1: memref<32x128xbf16, #tpu.memory_space<vmem>>, %arg2: memref<4x32xbf16, #tpu.memory_space<vmem>>, %arg3: memref<4x1xf32, #tpu.memory_space<vmem>>, %arg4: memref<4x32xbf16, #tpu.memory_space<vmem>>, %arg5: memref<4x1xf32, #tpu.memory_space<vmem>>, %arg6: memref<32x32xbf16, #tpu.memory_space<vmem>>, %arg7: memref<32x1xf32, #tpu.memory_space<vmem>>, %arg8: memref<1x1xf32, #tpu.memory_space<smem>>, %arg9: memref<32x128xf32, #tpu.memory_space<vmem>>) attributes {dimension_semantics = [#tpu.dimension_semantics<parallel>], iteration_bounds = array<i64: 2>, scalar_prefetch = 0 : i64, scratch_operands = 0 : i64, tpu.core_type = #tpu.core_type<tc>, window_params = [{transform_indices = @transform_0, window_bounds = array<i64: 32, 128>}, {pipeline_mode = #tpu.pipeline_mode<synchronous>, transform_indices = @transform_1, window_bounds = array<i64: 4, 32>}, {pipeline_mode = #tpu.pipeline_mode<synchronous>, transform_indices = @transform_2, window_bounds = array<i64: 4, 1>}, {pipeline_mode = #tpu.pipeline_mode<synchronous>, transform_indices = @transform_3, window_bounds = array<i64: 4, 32>}, {pipeline_mode = #tpu.pipeline_mode<synchronous>, transform_indices = @transform_4, window_bounds = array<i64: 4, 1>}, {pipeline_mode = #tpu.pipeline_mode<synchronous>, transform_indices = @transform_5, window_bounds = array<i64: 32, 32>}, {pipeline_mode = #tpu.pipeline_mode<synchronous>, transform_indices = @transform_6, window_bounds = array<i64: 32, 1>}, {transform_indices = @transform_7, window_bounds = array<i64: 1, 1>}, {transform_indices = @transform_8, window_bounds = array<i64: 32, 128>}]} {
    %c0 = arith.constant 0 : index
    %c0_0 = arith.constant 0 : index
    %0 = vector.load %arg1[%c0, %c0_0] : memref<32x128xbf16, #tpu.memory_space<vmem>>, vector<32x128xbf16>
    %1 = arith.extf %0 : vector<32x128xbf16> to vector<32x128xf32>
    %c0_1 = arith.constant 0 : index
    %c0_2 = arith.constant 0 : index
    %2 = vector.load %arg2[%c0_1, %c0_2] : memref<4x32xbf16, #tpu.memory_space<vmem>>, vector<4x32xbf16>
    %cst = arith.constant dense<0.000000e+00> : vector<4x128xf32>
    %3 = tpu.matmul %2, %0, %cst {dimension_numbers = #tpu.dot_dimension_numbers<[1], [0], [0], [1], [0, 0, 1, 1], [], []>} : vector<4x32xbf16>, vector<32x128xbf16>, vector<4x128xf32> -> vector<4x128xf32>
    %c0_3 = arith.constant 0 : index
    %c0_4 = arith.constant 0 : index
    %4 = vector.load %arg3[%c0_3, %c0_4] : memref<4x1xf32, #tpu.memory_space<vmem>>, vector<4x1xf32>
    %5 = vector.broadcast %4 : vector<4x1xf32> to vector<4x128xf32>
    %6 = arith.addf %3, %5 : vector<4x128xf32>
    %c0_5 = arith.constant 0 : index
    %c0_6 = arith.constant 0 : index
    %7 = vector.load %arg4[%c0_5, %c0_6] : memref<4x32xbf16, #tpu.memory_space<vmem>>, vector<4x32xbf16>
    %cst_7 = arith.constant dense<0.000000e+00> : vector<4x128xf32>
    %8 = tpu.matmul %7, %0, %cst_7 {dimension_numbers = #tpu.dot_dimension_numbers<[1], [0], [0], [1], [0, 0, 1, 1], [], []>} : vector<4x32xbf16>, vector<32x128xbf16>, vector<4x128xf32> -> vector<4x128xf32>
    %c0_8 = arith.constant 0 : index
    %c0_9 = arith.constant 0 : index
    %9 = vector.load %arg5[%c0_8, %c0_9] : memref<4x1xf32, #tpu.memory_space<vmem>>, vector<4x1xf32>
    %10 = vector.broadcast %9 : vector<4x1xf32> to vector<4x128xf32>
    %11 = arith.addf %8, %10 : vector<4x128xf32>
    %c0_10 = arith.constant 0 : index
    %c0_11 = arith.constant 0 : index
    %12 = vector.load %arg6[%c0_10, %c0_11] : memref<32x32xbf16, #tpu.memory_space<vmem>>, vector<32x32xbf16>
    %cst_12 = arith.constant dense<0.000000e+00> : vector<32x128xf32>
    %13 = tpu.matmul %12, %0, %cst_12 {dimension_numbers = #tpu.dot_dimension_numbers<[1], [0], [0], [1], [0, 0, 1, 1], [], []>} : vector<32x32xbf16>, vector<32x128xbf16>, vector<32x128xf32> -> vector<32x128xf32>
    %c0_13 = arith.constant 0 : index
    %c0_14 = arith.constant 0 : index
    %14 = vector.load %arg7[%c0_13, %c0_14] : memref<32x1xf32, #tpu.memory_space<vmem>>, vector<32x1xf32>
    %15 = vector.broadcast %14 : vector<32x1xf32> to vector<32x128xf32>
    %16 = arith.addf %13, %15 : vector<32x128xf32>
    %17 = tpu.transpose %6, [1, 0] : vector<4x128xf32> -> vector<128x4xf32>
    %18 = vector.extract_strided_slice %17 {offsets = [0, 0], sizes = [16, 4], strides = [1, 1]} : vector<128x4xf32> to vector<16x4xf32>
    %19 = vector.extract_strided_slice %11 {offsets = [0, 0], sizes = [4, 16], strides = [1, 1]} : vector<4x128xf32> to vector<4x16xf32>
    %20 = vector.extract_strided_slice %16 {offsets = [0, 0], sizes = [32, 16], strides = [1, 1]} : vector<32x128xf32> to vector<32x16xf32>
    %cst_15 = arith.constant dense<0.000000e+00> : vector<16x16xf32>
    %21 = tpu.matmul %18, %19, %cst_15 {dimension_numbers = #tpu.dot_dimension_numbers<[1], [0], [0], [1], [0, 0, 1, 1], [], []>} : vector<16x4xf32>, vector<4x16xf32>, vector<16x16xf32> -> vector<16x16xf32>
    %cst_16 = arith.constant dense<0xFF800000> : vector<16xf32>
    %22 = vector.multi_reduction <maximumf>, %21, %cst_16 [1] : vector<16x16xf32> to vector<16xf32>
    %23 = vector.shape_cast %22 : vector<16xf32> to vector<16x1xf32>
    %24 = vector.broadcast %23 : vector<16x1xf32> to vector<16x16xf32>
    %25 = arith.subf %21, %24 : vector<16x16xf32>
    %26 = math.exp %25 : vector<16x16xf32>
    %cst_17 = arith.constant dense<0.000000e+00> : vector<16xf32>
    %27 = vector.multi_reduction <add>, %26, %cst_17 [1] : vector<16x16xf32> to vector<16xf32>
    %28 = vector.shape_cast %27 : vector<16xf32> to vector<16x1xf32>
    %29 = tpu.reciprocal %28 {approx = true} : vector<16x1xf32> -> vector<16x1xf32>
    %30 = vector.broadcast %29 : vector<16x1xf32> to vector<16x16xf32>
    %31 = arith.mulf %26, %30 : vector<16x16xf32>
    %cst_18 = arith.constant dense<0.000000e+00> : vector<32x16xf32>
    %32 = tpu.matmul %20, %31, %cst_18 {dimension_numbers = #tpu.dot_dimension_numbers<[1], [1], [0], [0], [0, 0, 1, 0], [], []>} : vector<32x16xf32>, vector<16x16xf32>, vector<32x16xf32> -> vector<32x16xf32>
    %33 = vector.extract_strided_slice %17 {offsets = [16, 0], sizes = [16, 4], strides = [1, 1]} : vector<128x4xf32> to vector<16x4xf32>
    %34 = vector.extract_strided_slice %11 {offsets = [0, 16], sizes = [4, 16], strides = [1, 1]} : vector<4x128xf32> to vector<4x16xf32>
    %35 = vector.extract_strided_slice %16 {offsets = [0, 16], sizes = [32, 16], strides = [1, 1]} : vector<32x128xf32> to vector<32x16xf32>
    %cst_19 = arith.constant dense<0.000000e+00> : vector<16x16xf32>
    %36 = tpu.matmul %33, %34, %cst_19 {dimension_numbers = #tpu.dot_dimension_numbers<[1], [0], [0], [1], [0, 0, 1, 1], [], []>} : vector<16x4xf32>, vector<4x16xf32>, vector<16x16xf32> -> vector<16x16xf32>
    %cst_20 = arith.constant dense<0xFF800000> : vector<16xf32>
    %37 = vector.multi_reduction <maximumf>, %36, %cst_20 [1] : vector<16x16xf32> to vector<16xf32>
    %38 = vector.shape_cast %37 : vector<16xf32> to vector<16x1xf32>
    %39 = vector.broadcast %38 : vector<16x1xf32> to vector<16x16xf32>
    %40 = arith.subf %36, %39 : vector<16x16xf32>
    %41 = math.exp %40 : vector<16x16xf32>
    %cst_21 = arith.constant dense<0.000000e+00> : vector<16xf32>
    %42 = vector.multi_reduction <add>, %41, %cst_21 [1] : vector<16x16xf32> to vector<16xf32>
    %43 = vector.shape_cast %42 : vector<16xf32> to vector<16x1xf32>
    %44 = tpu.reciprocal %43 {approx = true} : vector<16x1xf32> -> vector<16x1xf32>
    %45 = vector.broadcast %44 : vector<16x1xf32> to vector<16x16xf32>
    %46 = arith.mulf %41, %45 : vector<16x16xf32>
    %cst_22 = arith.constant dense<0.000000e+00> : vector<32x16xf32>
    %47 = tpu.matmul %35, %46, %cst_22 {dimension_numbers = #tpu.dot_dimension_numbers<[1], [1], [0], [0], [0, 0, 1, 0], [], []>} : vector<32x16xf32>, vector<16x16xf32>, vector<32x16xf32> -> vector<32x16xf32>
    %48 = vector.extract_strided_slice %17 {offsets = [32, 0], sizes = [16, 4], strides = [1, 1]} : vector<128x4xf32> to vector<16x4xf32>
    %49 = vector.extract_strided_slice %11 {offsets = [0, 32], sizes = [4, 16], strides = [1, 1]} : vector<4x128xf32> to vector<4x16xf32>
    %50 = vector.extract_strided_slice %16 {offsets = [0, 32], sizes = [32, 16], strides = [1, 1]} : vector<32x128xf32> to vector<32x16xf32>
    %cst_23 = arith.constant dense<0.000000e+00> : vector<16x16xf32>
    %51 = tpu.matmul %48, %49, %cst_23 {dimension_numbers = #tpu.dot_dimension_numbers<[1], [0], [0], [1], [0, 0, 1, 1], [], []>} : vector<16x4xf32>, vector<4x16xf32>, vector<16x16xf32> -> vector<16x16xf32>
    %cst_24 = arith.constant dense<0xFF800000> : vector<16xf32>
    %52 = vector.multi_reduction <maximumf>, %51, %cst_24 [1] : vector<16x16xf32> to vector<16xf32>
    %53 = vector.shape_cast %52 : vector<16xf32> to vector<16x1xf32>
    %54 = vector.broadcast %53 : vector<16x1xf32> to vector<16x16xf32>
    %55 = arith.subf %51, %54 : vector<16x16xf32>
    %56 = math.exp %55 : vector<16x16xf32>
    %cst_25 = arith.constant dense<0.000000e+00> : vector<16xf32>
    %57 = vector.multi_reduction <add>, %56, %cst_25 [1] : vector<16x16xf32> to vector<16xf32>
    %58 = vector.shape_cast %57 : vector<16xf32> to vector<16x1xf32>
    %59 = tpu.reciprocal %58 {approx = true} : vector<16x1xf32> -> vector<16x1xf32>
    %60 = vector.broadcast %59 : vector<16x1xf32> to vector<16x16xf32>
    %61 = arith.mulf %56, %60 : vector<16x16xf32>
    %cst_26 = arith.constant dense<0.000000e+00> : vector<32x16xf32>
    %62 = tpu.matmul %50, %61, %cst_26 {dimension_numbers = #tpu.dot_dimension_numbers<[1], [1], [0], [0], [0, 0, 1, 0], [], []>} : vector<32x16xf32>, vector<16x16xf32>, vector<32x16xf32> -> vector<32x16xf32>
    %63 = vector.extract_strided_slice %17 {offsets = [48, 0], sizes = [16, 4], strides = [1, 1]} : vector<128x4xf32> to vector<16x4xf32>
    %64 = vector.extract_strided_slice %11 {offsets = [0, 48], sizes = [4, 16], strides = [1, 1]} : vector<4x128xf32> to vector<4x16xf32>
    %65 = vector.extract_strided_slice %16 {offsets = [0, 48], sizes = [32, 16], strides = [1, 1]} : vector<32x128xf32> to vector<32x16xf32>
    %cst_27 = arith.constant dense<0.000000e+00> : vector<16x16xf32>
    %66 = tpu.matmul %63, %64, %cst_27 {dimension_numbers = #tpu.dot_dimension_numbers<[1], [0], [0], [1], [0, 0, 1, 1], [], []>} : vector<16x4xf32>, vector<4x16xf32>, vector<16x16xf32> -> vector<16x16xf32>
    %cst_28 = arith.constant dense<0xFF800000> : vector<16xf32>
    %67 = vector.multi_reduction <maximumf>, %66, %cst_28 [1] : vector<16x16xf32> to vector<16xf32>
    %68 = vector.shape_cast %67 : vector<16xf32> to vector<16x1xf32>
    %69 = vector.broadcast %68 : vector<16x1xf32> to vector<16x16xf32>
    %70 = arith.subf %66, %69 : vector<16x16xf32>
    %71 = math.exp %70 : vector<16x16xf32>
    %cst_29 = arith.constant dense<0.000000e+00> : vector<16xf32>
    %72 = vector.multi_reduction <add>, %71, %cst_29 [1] : vector<16x16xf32> to vector<16xf32>
    %73 = vector.shape_cast %72 : vector<16xf32> to vector<16x1xf32>
    %74 = tpu.reciprocal %73 {approx = true} : vector<16x1xf32> -> vector<16x1xf32>
    %75 = vector.broadcast %74 : vector<16x1xf32> to vector<16x16xf32>
    %76 = arith.mulf %71, %75 : vector<16x16xf32>
    %cst_30 = arith.constant dense<0.000000e+00> : vector<32x16xf32>
    %77 = tpu.matmul %65, %76, %cst_30 {dimension_numbers = #tpu.dot_dimension_numbers<[1], [1], [0], [0], [0, 0, 1, 0], [], []>} : vector<32x16xf32>, vector<16x16xf32>, vector<32x16xf32> -> vector<32x16xf32>
    %78 = vector.extract_strided_slice %17 {offsets = [64, 0], sizes = [16, 4], strides = [1, 1]} : vector<128x4xf32> to vector<16x4xf32>
    %79 = vector.extract_strided_slice %11 {offsets = [0, 64], sizes = [4, 16], strides = [1, 1]} : vector<4x128xf32> to vector<4x16xf32>
    %80 = vector.extract_strided_slice %16 {offsets = [0, 64], sizes = [32, 16], strides = [1, 1]} : vector<32x128xf32> to vector<32x16xf32>
    %cst_31 = arith.constant dense<0.000000e+00> : vector<16x16xf32>
    %81 = tpu.matmul %78, %79, %cst_31 {dimension_numbers = #tpu.dot_dimension_numbers<[1], [0], [0], [1], [0, 0, 1, 1], [], []>} : vector<16x4xf32>, vector<4x16xf32>, vector<16x16xf32> -> vector<16x16xf32>
    %cst_32 = arith.constant dense<0xFF800000> : vector<16xf32>
    %82 = vector.multi_reduction <maximumf>, %81, %cst_32 [1] : vector<16x16xf32> to vector<16xf32>
    %83 = vector.shape_cast %82 : vector<16xf32> to vector<16x1xf32>
    %84 = vector.broadcast %83 : vector<16x1xf32> to vector<16x16xf32>
    %85 = arith.subf %81, %84 : vector<16x16xf32>
    %86 = math.exp %85 : vector<16x16xf32>
    %cst_33 = arith.constant dense<0.000000e+00> : vector<16xf32>
    %87 = vector.multi_reduction <add>, %86, %cst_33 [1] : vector<16x16xf32> to vector<16xf32>
    %88 = vector.shape_cast %87 : vector<16xf32> to vector<16x1xf32>
    %89 = tpu.reciprocal %88 {approx = true} : vector<16x1xf32> -> vector<16x1xf32>
    %90 = vector.broadcast %89 : vector<16x1xf32> to vector<16x16xf32>
    %91 = arith.mulf %86, %90 : vector<16x16xf32>
    %cst_34 = arith.constant dense<0.000000e+00> : vector<32x16xf32>
    %92 = tpu.matmul %80, %91, %cst_34 {dimension_numbers = #tpu.dot_dimension_numbers<[1], [1], [0], [0], [0, 0, 1, 0], [], []>} : vector<32x16xf32>, vector<16x16xf32>, vector<32x16xf32> -> vector<32x16xf32>
    %93 = vector.extract_strided_slice %17 {offsets = [80, 0], sizes = [16, 4], strides = [1, 1]} : vector<128x4xf32> to vector<16x4xf32>
    %94 = vector.extract_strided_slice %11 {offsets = [0, 80], sizes = [4, 16], strides = [1, 1]} : vector<4x128xf32> to vector<4x16xf32>
    %95 = vector.extract_strided_slice %16 {offsets = [0, 80], sizes = [32, 16], strides = [1, 1]} : vector<32x128xf32> to vector<32x16xf32>
    %cst_35 = arith.constant dense<0.000000e+00> : vector<16x16xf32>
    %96 = tpu.matmul %93, %94, %cst_35 {dimension_numbers = #tpu.dot_dimension_numbers<[1], [0], [0], [1], [0, 0, 1, 1], [], []>} : vector<16x4xf32>, vector<4x16xf32>, vector<16x16xf32> -> vector<16x16xf32>
    %cst_36 = arith.constant dense<0xFF800000> : vector<16xf32>
    %97 = vector.multi_reduction <maximumf>, %96, %cst_36 [1] : vector<16x16xf32> to vector<16xf32>
    %98 = vector.shape_cast %97 : vector<16xf32> to vector<16x1xf32>
    %99 = vector.broadcast %98 : vector<16x1xf32> to vector<16x16xf32>
    %100 = arith.subf %96, %99 : vector<16x16xf32>
    %101 = math.exp %100 : vector<16x16xf32>
    %cst_37 = arith.constant dense<0.000000e+00> : vector<16xf32>
    %102 = vector.multi_reduction <add>, %101, %cst_37 [1] : vector<16x16xf32> to vector<16xf32>
    %103 = vector.shape_cast %102 : vector<16xf32> to vector<16x1xf32>
    %104 = tpu.reciprocal %103 {approx = true} : vector<16x1xf32> -> vector<16x1xf32>
    %105 = vector.broadcast %104 : vector<16x1xf32> to vector<16x16xf32>
    %106 = arith.mulf %101, %105 : vector<16x16xf32>
    %cst_38 = arith.constant dense<0.000000e+00> : vector<32x16xf32>
    %107 = tpu.matmul %95, %106, %cst_38 {dimension_numbers = #tpu.dot_dimension_numbers<[1], [1], [0], [0], [0, 0, 1, 0], [], []>} : vector<32x16xf32>, vector<16x16xf32>, vector<32x16xf32> -> vector<32x16xf32>
    %108 = vector.extract_strided_slice %17 {offsets = [96, 0], sizes = [16, 4], strides = [1, 1]} : vector<128x4xf32> to vector<16x4xf32>
    %109 = vector.extract_strided_slice %11 {offsets = [0, 96], sizes = [4, 16], strides = [1, 1]} : vector<4x128xf32> to vector<4x16xf32>
    %110 = vector.extract_strided_slice %16 {offsets = [0, 96], sizes = [32, 16], strides = [1, 1]} : vector<32x128xf32> to vector<32x16xf32>
    %cst_39 = arith.constant dense<0.000000e+00> : vector<16x16xf32>
    %111 = tpu.matmul %108, %109, %cst_39 {dimension_numbers = #tpu.dot_dimension_numbers<[1], [0], [0], [1], [0, 0, 1, 1], [], []>} : vector<16x4xf32>, vector<4x16xf32>, vector<16x16xf32> -> vector<16x16xf32>
    %cst_40 = arith.constant dense<0xFF800000> : vector<16xf32>
    %112 = vector.multi_reduction <maximumf>, %111, %cst_40 [1] : vector<16x16xf32> to vector<16xf32>
    %113 = vector.shape_cast %112 : vector<16xf32> to vector<16x1xf32>
    %114 = vector.broadcast %113 : vector<16x1xf32> to vector<16x16xf32>
    %115 = arith.subf %111, %114 : vector<16x16xf32>
    %116 = math.exp %115 : vector<16x16xf32>
    %cst_41 = arith.constant dense<0.000000e+00> : vector<16xf32>
    %117 = vector.multi_reduction <add>, %116, %cst_41 [1] : vector<16x16xf32> to vector<16xf32>
    %118 = vector.shape_cast %117 : vector<16xf32> to vector<16x1xf32>
    %119 = tpu.reciprocal %118 {approx = true} : vector<16x1xf32> -> vector<16x1xf32>
    %120 = vector.broadcast %119 : vector<16x1xf32> to vector<16x16xf32>
    %121 = arith.mulf %116, %120 : vector<16x16xf32>
    %cst_42 = arith.constant dense<0.000000e+00> : vector<32x16xf32>
    %122 = tpu.matmul %110, %121, %cst_42 {dimension_numbers = #tpu.dot_dimension_numbers<[1], [1], [0], [0], [0, 0, 1, 0], [], []>} : vector<32x16xf32>, vector<16x16xf32>, vector<32x16xf32> -> vector<32x16xf32>
    %123 = vector.extract_strided_slice %17 {offsets = [112, 0], sizes = [16, 4], strides = [1, 1]} : vector<128x4xf32> to vector<16x4xf32>
    %124 = vector.extract_strided_slice %11 {offsets = [0, 112], sizes = [4, 16], strides = [1, 1]} : vector<4x128xf32> to vector<4x16xf32>
    %125 = vector.extract_strided_slice %16 {offsets = [0, 112], sizes = [32, 16], strides = [1, 1]} : vector<32x128xf32> to vector<32x16xf32>
    %cst_43 = arith.constant dense<0.000000e+00> : vector<16x16xf32>
    %126 = tpu.matmul %123, %124, %cst_43 {dimension_numbers = #tpu.dot_dimension_numbers<[1], [0], [0], [1], [0, 0, 1, 1], [], []>} : vector<16x4xf32>, vector<4x16xf32>, vector<16x16xf32> -> vector<16x16xf32>
    %cst_44 = arith.constant dense<0xFF800000> : vector<16xf32>
    %127 = vector.multi_reduction <maximumf>, %126, %cst_44 [1] : vector<16x16xf32> to vector<16xf32>
    %128 = vector.shape_cast %127 : vector<16xf32> to vector<16x1xf32>
    %129 = vector.broadcast %128 : vector<16x1xf32> to vector<16x16xf32>
    %130 = arith.subf %126, %129 : vector<16x16xf32>
    %131 = math.exp %130 : vector<16x16xf32>
    %cst_45 = arith.constant dense<0.000000e+00> : vector<16xf32>
    %132 = vector.multi_reduction <add>, %131, %cst_45 [1] : vector<16x16xf32> to vector<16xf32>
    %133 = vector.shape_cast %132 : vector<16xf32> to vector<16x1xf32>
    %134 = tpu.reciprocal %133 {approx = true} : vector<16x1xf32> -> vector<16x1xf32>
    %135 = vector.broadcast %134 : vector<16x1xf32> to vector<16x16xf32>
    %136 = arith.mulf %131, %135 : vector<16x16xf32>
    %cst_46 = arith.constant dense<0.000000e+00> : vector<32x16xf32>
    %137 = tpu.matmul %125, %136, %cst_46 {dimension_numbers = #tpu.dot_dimension_numbers<[1], [1], [0], [0], [0, 0, 1, 0], [], []>} : vector<32x16xf32>, vector<16x16xf32>, vector<32x16xf32> -> vector<32x16xf32>
    %138 = tpu.concatenate %32, %47, %62, %77, %92, %107, %122, %137 in 1 : vector<32x16xf32>, vector<32x16xf32>, vector<32x16xf32>, vector<32x16xf32>, vector<32x16xf32>, vector<32x16xf32>, vector<32x16xf32>, vector<32x16xf32> -> vector<32x128xf32>
    %c0_47 = arith.constant 0 : index
    %c0_48 = arith.constant 0 : index
    %139 = memref.load %arg8[%c0_47, %c0_48] : memref<1x1xf32, #tpu.memory_space<smem>>
    %140 = vector.broadcast %139 : f32 to vector<32x128xf32>
    %141 = arith.mulf %140, %138 : vector<32x128xf32>
    %142 = arith.addf %141, %1 : vector<32x128xf32>
    %c0_49 = arith.constant 0 : index
    %c0_50 = arith.constant 0 : index
    %143 = vector.load %arg9[%c0_49, %c0_50] : memref<32x128xf32, #tpu.memory_space<vmem>>, vector<32x128xf32>
    tpu.vector_store %arg9[%c0_49, %c0_50], %142 {strides = array<i32>} : memref<32x128xf32, #tpu.memory_space<vmem>>, vector<32x128xf32>,
    return
  }
  func.func @transform_0(%arg0: i32) -> (i32, i32) {
    %c0_i32 = arith.constant 0 : i32
    %c0_i32_0 = arith.constant 0 : i32
    return %c0_i32, %arg0 : i32, i32
  }
  func.func @transform_1(%arg0: i32) -> (i32, i32) {
    %c0_i32 = arith.constant 0 : i32
    %c0_i32_0 = arith.constant 0 : i32
    %c0_i32_1 = arith.constant 0 : i32
    return %c0_i32, %c0_i32_0 : i32, i32
  }
  func.func @transform_2(%arg0: i32) -> (i32, i32) {
    %c0_i32 = arith.constant 0 : i32
    %c0_i32_0 = arith.constant 0 : i32
    %c0_i32_1 = arith.constant 0 : i32
    return %c0_i32, %c0_i32_0 : i32, i32
  }
  func.func @transform_3(%arg0: i32) -> (i32, i32) {
    %c0_i32 = arith.constant 0 : i32
    %c0_i32_0 = arith.constant 0 : i32
    %c0_i32_1 = arith.constant 0 : i32
    return %c0_i32, %c0_i32_0 : i32, i32
  }
  func.func @transform_4(%arg0: i32) -> (i32, i32) {
    %c0_i32 = arith.constant 0 : i32
    %c0_i32_0 = arith.constant 0 : i32
    %c0_i32_1 = arith.constant 0 : i32
    return %c0_i32, %c0_i32_0 : i32, i32
  }
  func.func @transform_5(%arg0: i32) -> (i32, i32) {
    %c0_i32 = arith.constant 0 : i32
    %c0_i32_0 = arith.constant 0 : i32
    %c0_i32_1 = arith.constant 0 : i32
    return %c0_i32, %c0_i32_0 : i32, i32
  }
  func.func @transform_6(%arg0: i32) -> (i32, i32) {
    %c0_i32 = arith.constant 0 : i32
    %c0_i32_0 = arith.constant 0 : i32
    %c0_i32_1 = arith.constant 0 : i32
    return %c0_i32, %c0_i32_0 : i32, i32
  }
  func.func @transform_7(%arg0: i32) -> (i32, i32) {
    %c0_i32 = arith.constant 0 : i32
    %c0_i32_0 = arith.constant 0 : i32
    %c0_i32_1 = arith.constant 0 : i32
    return %c0_i32, %c0_i32_0 : i32, i32
  }
  func.func @transform_8(%arg0: i32) -> (i32, i32) {
    %c0_i32 = arith.constant 0 : i32
    %c0_i32_0 = arith.constant 0 : i32
    return %c0_i32, %arg0 : i32, i32
  }
}

</mosaic_0001>

<llo_original>
// kernel: tpu_custom_call.1
$region0: #{tpu_custom_call.1}
  #allocation0 [shape = 'u32[]', space=smem, size = 0x4, offset = 0x4, fixed_abs, tag = 'smem constant byte address 0x4 - core index']
  #allocation1 [shape = 'u32[144,128]{1,0:T(1,128)}', space=vmem, size = 0x12000, scoped, tag = 'internal scratch']
  #allocation2 [shape = 'f32[1,1]{1,0:T(1,128)S(6)}', space=smem, size = 0x200, scoped, tag = 'scoped memory for tpu_custom_call.1']
  %s0 = inlined_call_operand.vmem [shape: bf16[32,256], index: 0, kind: input, shape index: {}]
  %s1 = inlined_call_operand.vmem [shape: bf16[4,32], index: 1, kind: input, shape index: {}]
  %s2 = inlined_call_operand.vmem [shape: f32[4,1], index: 2, kind: input, shape index: {}]
  %s3 = inlined_call_operand.vmem [shape: bf16[4,32], index: 3, kind: input, shape index: {}]
  %s4 = inlined_call_operand.vmem [shape: f32[4,1], index: 4, kind: input, shape index: {}]
  %s5 = inlined_call_operand.vmem [shape: bf16[32,32], index: 5, kind: input, shape index: {}]
  %s6 = inlined_call_operand.vmem [shape: f32[32,1], index: 6, kind: input, shape index: {}]
  %s7 = inlined_call_operand.<no memory space> [shape: f32[1,1], index: 7, kind: input, shape index: {}]
  %s8 = inlined_call_operand.hbm [shape: f32[32,256], index: 8, kind: output, shape index: {}]
  %s9 = sld [smem:[#allocation0]]
  $region106: #{tpu_custom_call.1} parent=0
    _
  %s11 = ssub.s32 1, %s9
  %s12 = scalar_select 0, %s11, %s9
  %13 = sst [smem:[#allocation2]] %s7
  $region1: #{tpu_custom_call.1} parent=0
    #allocation3 [shape = 'u8[16384]{0}', space=vmem, size = 0x4000, scoped, tag = 'input window, operand 0']
    #allocation4 [shape = 'u8[32768]{0}', space=vmem, size = 0x8000, scoped, tag = 'output window, operand 0']
    #allocation5 [shape = 's32[2]{0}', space=sflag, size = 0x8, scoped, tag = 'scoped memory for tpu_custom_call.1']
    %14 = vsyncpa [#allocation5], 0
    %s15 = scalar_lea.sflag [#allocation5], 1
    %16 = vsyncpa %s15, 0
    loop: start=0, step=1, limit=4
    $region2: #{tpu_custom_call.1} parent=1 // loop_pre_header
      _
    $region3: #{tpu_custom_call.1} parent=1 // loop_header
      %s18 = sphi 0, %s22
      %p19 = scmp.ge.s32.totalorder %s18, 4
      %s28 = sphi 0, %s30
      %s31 = sphi 0, %s28
      %s32 = sphi 0, %s31
      %s48 = sphi 0, %s32
      %s52 = sphi 0, %s52
      %s54 = sphi 0, %s52
      %s55 = sphi 0, %s54
      %s69 = sphi 0, %s55
      %s73 = sphi 0, %s73
      %s75 = sphi 0, %s73
      %s76 = sphi 0, %s75
      %s90 = sphi 0, %s76
      %s94 = sphi 0, %s94
      %s96 = sphi 0, %s94
      %s97 = sphi 0, %s96
      %s111 = sphi 0, %s97
      %s115 = sphi 0, %s115
      %s117 = sphi 0, %s115
      %s118 = sphi 0, %s117
      %s132 = sphi 0, %s118
      %s136 = sphi 0, %s136
      %s138 = sphi 0, %s136
      %s139 = sphi 0, %s138
      %s153 = sphi 0, %s139
      %s157 = sphi 0, %s157
      %s159 = sphi 0, %s157
      %s160 = sphi 0, %s159
      %s174 = sphi 0, %s160
      %s178 = sphi 0, %s178
      %s180 = sphi 0, %s178
      %s181 = sphi 0, %s180
      %s195 = sphi 0, %s181
      %s201 = sphi 0, %s203
      %s204 = sphi 0, %s201
      %s205 = sphi 0, %s204
      %s221 = sphi 0, %s205
    $region4: #{tpu_custom_call.1} parent=1 // loop_header_branch
      %21 = sbr.rel (%p19) target = $region8
    $region5: #{tpu_custom_call.1} parent=1 // loop_body
      %s23 = ssub.s32 %s18, 1
      %s24 = ssub.s32 %s18, 2
      %s25 = sadd.s32 %s18, 1
      %s26 = ssub.s32 %s18, %s25
      %p27 = scmp.eq.s32.totalorder %s26, 0
      %s29 = sadd.s32 %s28, 1
      %s30 = scalar_select %p27, %s28, %s29
      %p33 = pneg %p27
      %p34 = scmp.eq.s32.totalorder %s18, 1
      %p35 = por %p33, %p34
      %p36 = scmp.ne.s32.totalorder %s28, %s31
      %p37 = scmp.eq.s32.totalorder %s18, 0
      %p38 = por %p36, %p37
      %p39 = scmp.ne.s32.totalorder %s28, %s31
      %p40 = scmp.eq.s32.totalorder %s23, 1
      %p41 = por %p39, %p40
      %p42 = scmp.ne.s32.totalorder %s31, %s32
      %p43 = scmp.eq.s32.totalorder %s23, 0
      %p44 = por %p42, %p43
      %p45 = scmp.ne.s32.totalorder %s31, %s32
      %p46 = scmp.eq.s32.totalorder %s24, 1
      %p47 = por %p45, %p46
      %p49 = scmp.ne.s32.totalorder %s32, %s48
      %p50 = scmp.eq.s32.totalorder %s24, 0
      %p51 = por %p49, %p50
      %s53 = sadd.s32 %s52, 1
      %p56 = scmp.eq.s32.totalorder %s18, 1
      %p57 = scmp.ne.s32.totalorder %s52, %s54
      %p58 = scmp.eq.s32.totalorder %s18, 0
      %p59 = por %p57, %p58
      %p60 = scmp.ne.s32.totalorder %s52, %s54
      %p61 = scmp.eq.s32.totalorder %s23, 1
      %p62 = por %p60, %p61
      %p63 = scmp.ne.s32.totalorder %s54, %s55
      %p64 = scmp.eq.s32.totalorder %s23, 0
      %p65 = por %p63, %p64
      %p66 = scmp.ne.s32.totalorder %s54, %s55
      %p67 = scmp.eq.s32.totalorder %s24, 1
      %p68 = por %p66, %p67
      %p70 = scmp.ne.s32.totalorder %s55, %s69
      %p71 = scmp.eq.s32.totalorder %s24, 0
      %p72 = por %p70, %p71
      %s74 = sadd.s32 %s73, 1
      %p77 = scmp.eq.s32.totalorder %s18, 1
      %p78 = scmp.ne.s32.totalorder %s73, %s75
      %p79 = scmp.eq.s32.totalorder %s18, 0
      %p80 = por %p78, %p79
      %p81 = scmp.ne.s32.totalorder %s73, %s75
      %p82 = scmp.eq.s32.totalorder %s23, 1
      %p83 = por %p81, %p82
      %p84 = scmp.ne.s32.totalorder %s75, %s76
      %p85 = scmp.eq.s32.totalorder %s23, 0
      %p86 = por %p84, %p85
      %p87 = scmp.ne.s32.totalorder %s75, %s76
      %p88 = scmp.eq.s32.totalorder %s24, 1
      %p89 = por %p87, %p88
      %p91 = scmp.ne.s32.totalorder %s76, %s90
      %p92 = scmp.eq.s32.totalorder %s24, 0
      %p93 = por %p91, %p92
      %s95 = sadd.s32 %s94, 1
      %p98 = scmp.eq.s32.totalorder %s18, 1
      %p99 = scmp.ne.s32.totalorder %s94, %s96
      %p100 = scmp.eq.s32.totalorder %s18, 0
      %p101 = por %p99, %p100
      %p102 = scmp.ne.s32.totalorder %s94, %s96
      %p103 = scmp.eq.s32.totalorder %s23, 1
      %p104 = por %p102, %p103
      %p105 = scmp.ne.s32.totalorder %s96, %s97
      %p106 = scmp.eq.s32.totalorder %s23, 0
      %p107 = por %p105, %p106
      %p108 = scmp.ne.s32.totalorder %s96, %s97
      %p109 = scmp.eq.s32.totalorder %s24, 1
      %p110 = por %p108, %p109
      %p112 = scmp.ne.s32.totalorder %s97, %s111
      %p113 = scmp.eq.s32.totalorder %s24, 0
      %p114 = por %p112, %p113
      %s116 = sadd.s32 %s115, 1
      %p119 = scmp.eq.s32.totalorder %s18, 1
      %p120 = scmp.ne.s32.totalorder %s115, %s117
      %p121 = scmp.eq.s32.totalorder %s18, 0
      %p122 = por %p120, %p121
      %p123 = scmp.ne.s32.totalorder %s115, %s117
      %p124 = scmp.eq.s32.totalorder %s23, 1
      %p125 = por %p123, %p124
      %p126 = scmp.ne.s32.totalorder %s117, %s118
      %p127 = scmp.eq.s32.totalorder %s23, 0
      %p128 = por %p126, %p127
      %p129 = scmp.ne.s32.totalorder %s117, %s118
      %p130 = scmp.eq.s32.totalorder %s24, 1
      %p131 = por %p129, %p130
      %p133 = scmp.ne.s32.totalorder %s118, %s132
      %p134 = scmp.eq.s32.totalorder %s24, 0
      %p135 = por %p133, %p134
      %s137 = sadd.s32 %s136, 1
      %p140 = scmp.eq.s32.totalorder %s18, 1
      %p141 = scmp.ne.s32.totalorder %s136, %s138
      %p142 = scmp.eq.s32.totalorder %s18, 0
      %p143 = por %p141, %p142
      %p144 = scmp.ne.s32.totalorder %s136, %s138
      %p145 = scmp.eq.s32.totalorder %s23, 1
      %p146 = por %p144, %p145
      %p147 = scmp.ne.s32.totalorder %s138, %s139
      %p148 = scmp.eq.s32.totalorder %s23, 0
      %p149 = por %p147, %p148
      %p150 = scmp.ne.s32.totalorder %s138, %s139
      %p151 = scmp.eq.s32.totalorder %s24, 1
      %p152 = por %p150, %p151
      %p154 = scmp.ne.s32.totalorder %s139, %s153
      %p155 = scmp.eq.s32.totalorder %s24, 0
      %p156 = por %p154, %p155
      %s158 = sadd.s32 %s157, 1
      %p161 = scmp.eq.s32.totalorder %s18, 1
      %p162 = scmp.ne.s32.totalorder %s157, %s159
      %p163 = scmp.eq.s32.totalorder %s18, 0
      %p164 = por %p162, %p163
      %p165 = scmp.ne.s32.totalorder %s157, %s159
      %p166 = scmp.eq.s32.totalorder %s23, 1
      %p167 = por %p165, %p166
      %p168 = scmp.ne.s32.totalorder %s159, %s160
      %p169 = scmp.eq.s32.totalorder %s23, 0
      %p170 = por %p168, %p169
      %p171 = scmp.ne.s32.totalorder %s159, %s160
      %p172 = scmp.eq.s32.totalorder %s24, 1
      %p173 = por %p171, %p172
      %p175 = scmp.ne.s32.totalorder %s160, %s174
      %p176 = scmp.eq.s32.totalorder %s24, 0
      %p177 = por %p175, %p176
      %s179 = sadd.s32 %s178, 1
      %p182 = scmp.eq.s32.totalorder %s18, 1
      %p183 = scmp.ne.s32.totalorder %s178, %s180
      %p184 = scmp.eq.s32.totalorder %s18, 0
      %p185 = por %p183, %p184
      %p186 = scmp.ne.s32.totalorder %s178, %s180
      %p187 = scmp.eq.s32.totalorder %s23, 1
      %p188 = por %p186, %p187
      %p189 = scmp.ne.s32.totalorder %s180, %s181
      %p190 = scmp.eq.s32.totalorder %s23, 0
      %p191 = por %p189, %p190
      %p192 = scmp.ne.s32.totalorder %s180, %s181
      %p193 = scmp.eq.s32.totalorder %s24, 1
      %p194 = por %p192, %p193
      %p196 = scmp.ne.s32.totalorder %s181, %s195
      %p197 = scmp.eq.s32.totalorder %s24, 0
      %p198 = por %p196, %p197
      %s199 = ssub.s32 %s18, %s25
      %p200 = scmp.eq.s32.totalorder %s199, 0
      %s202 = sadd.s32 %s201, 1
      %s203 = scalar_select %p200, %s201, %s202
      %p206 = pneg %p200
      %p207 = scmp.eq.s32.totalorder %s18, 1
      %p208 = por %p206, %p207
      %p209 = scmp.ne.s32.totalorder %s201, %s204
      %p210 = scmp.eq.s32.totalorder %s18, 0
      %p211 = por %p209, %p210
      %p212 = scmp.ne.s32.totalorder %s201, %s204
      %p213 = scmp.eq.s32.totalorder %s23, 1
      %p214 = por %p212, %p213
      %p215 = scmp.ne.s32.totalorder %s204, %s205
      %p216 = scmp.eq.s32.totalorder %s23, 0
      %p217 = por %p215, %p216
      %p218 = scmp.ne.s32.totalorder %s204, %s205
      %p219 = scmp.eq.s32.totalorder %s24, 1
      %p220 = por %p218, %p219
      %p222 = scmp.ne.s32.totalorder %s205, %s221
      %p223 = scmp.eq.s32.totalorder %s24, 0
      %p224 = por %p222, %p223
      %p225 = scmp.le.s32.totalorder 1, %s18
      %p226 = scmp.lt.s32.totalorder %s18, 3
      %p227 = pnand %p225, %p226
      %p228 = pneg %p227
      // Predicated region
      $region9: #{tpu_custom_call.1} parent=5 // pred_check
        _
      $region10: #{tpu_custom_call.1} parent=5 // pred_check_branch
        %230 = sbr.rel (%p227) target = $region12
      $region11: #{tpu_custom_call.1} parent=5 // pred_region
        %s231 = ssub.s32 %s18, 1
        // Predicated region
        $region13: #{tpu_custom_call.1} parent=11 // pred_check
          %p232 = pneg %p65
        $region14: #{tpu_custom_call.1} parent=11 // pred_check_branch
          %234 = sbr.rel (%p232) target = $region16
        $region15: #{tpu_custom_call.1} parent=11 // pred_region
          _
        $region16: #{tpu_custom_call.1} parent=11 // pred_fallthru
          _
        // Predicated region
        $region17: #{tpu_custom_call.1} parent=11 // pred_check
          %p235 = pneg %p86
        $region18: #{tpu_custom_call.1} parent=11 // pred_check_branch
          %237 = sbr.rel (%p235) target = $region20
        $region19: #{tpu_custom_call.1} parent=11 // pred_region
          _
        $region20: #{tpu_custom_call.1} parent=11 // pred_fallthru
          _
        // Predicated region
        $region21: #{tpu_custom_call.1} parent=11 // pred_check
          %p238 = pneg %p107
        $region22: #{tpu_custom_call.1} parent=11 // pred_check_branch
          %240 = sbr.rel (%p238) target = $region24
        $region23: #{tpu_custom_call.1} parent=11 // pred_region
          _
        $region24: #{tpu_custom_call.1} parent=11 // pred_fallthru
          _
        // Predicated region
        $region25: #{tpu_custom_call.1} parent=11 // pred_check
          %p241 = pneg %p128
        $region26: #{tpu_custom_call.1} parent=11 // pred_check_branch
          %243 = sbr.rel (%p241) target = $region28
        $region27: #{tpu_custom_call.1} parent=11 // pred_region
          _
        $region28: #{tpu_custom_call.1} parent=11 // pred_fallthru
          _
        // Predicated region
        $region29: #{tpu_custom_call.1} parent=11 // pred_check
          %p244 = pneg %p149
        $region30: #{tpu_custom_call.1} parent=11 // pred_check_branch
          %246 = sbr.rel (%p244) target = $region32
        $region31: #{tpu_custom_call.1} parent=11 // pred_region
          _
        $region32: #{tpu_custom_call.1} parent=11 // pred_fallthru
          _
        // Predicated region
        $region33: #{tpu_custom_call.1} parent=11 // pred_check
          %p247 = pneg %p170
        $region34: #{tpu_custom_call.1} parent=11 // pred_check_branch
          %249 = sbr.rel (%p247) target = $region36
        $region35: #{tpu_custom_call.1} parent=11 // pred_region
          _
        $region36: #{tpu_custom_call.1} parent=11 // pred_fallthru
          _
        // Predicated region
        $region37: #{tpu_custom_call.1} parent=11 // pred_check
          %p250 = pneg %p191
        $region38: #{tpu_custom_call.1} parent=11 // pred_check_branch
          %252 = sbr.rel (%p250) target = $region40
        $region39: #{tpu_custom_call.1} parent=11 // pred_region
          _
        $region40: #{tpu_custom_call.1} parent=11 // pred_fallthru
          _
      $region12: #{tpu_custom_call.1} parent=5 // pred_fallthru
        _
      %p253 = scmp.lt.s32.totalorder %s18, 2
      // Predicated region
      $region41: #{tpu_custom_call.1} parent=5 // pred_check
        %p254 = pneg %p253
      $region42: #{tpu_custom_call.1} parent=5 // pred_check_branch
        %256 = sbr.rel (%p254) target = $region44
      $region43: #{tpu_custom_call.1} parent=5 // pred_region
        // Predicated region
        $region45: #{tpu_custom_call.1} parent=43 // pred_check
          %p257 = pneg %p38
        $region46: #{tpu_custom_call.1} parent=43 // pred_check_branch
          %259 = sbr.rel (%p257) target = $region48
        $region47: #{tpu_custom_call.1} parent=43 // pred_region
          %s260 = sand.u32 %s28, 1
          %s261 = sand.u32 %s28, 1
          %s262 = smul.addr %s261, 16
          %s263 = scalar_lea.vmem [#allocation3], %s262
          %s264 = smul.addr %s18, 4
          %s265 = scalar_lea.vmem %s0, %s264
          // Predicated region
          $region49: #{tpu_custom_call.1} parent=47 // pred_check
            _
          $region50: #{tpu_custom_call.1} parent=47 // pred_check_branch
            %267 = sbr.rel (0) target = $region52
          $region51: #{tpu_custom_call.1} parent=47 // pred_region
            // Predicated region
            $region53: #{tpu_custom_call.1} parent=51 // pred_check
              _
            $region54: #{tpu_custom_call.1} parent=51 // pred_check_branch
              %269 = sbr.rel target = $region56
            $region55: #{tpu_custom_call.1} parent=51 // pred_region
              // Predicated region
              $region68: #{tpu_custom_call.1} parent=55 // pred_check
                _
              $region69: #{tpu_custom_call.1} parent=55 // pred_check_branch
                %290 = sbr.rel (0) target = $region71
              $region70: #{tpu_custom_call.1} parent=55 // pred_region
                loop: start=0, step=1, limit=1
                $region72: #{tpu_custom_call.1} parent=70 // loop_pre_header
                  _
                $region73: #{tpu_custom_call.1} parent=70 // loop_header
                  %s292 = sphi 0, %s296
                  %p293 = scmp.ge.s32.totalorder %s292, 1
                  %s297 = sphi %s265, %s265
                  %s298 = sphi %s263, %s263
                $region74: #{tpu_custom_call.1} parent=70 // loop_header_branch
                  %295 = sbr.rel (%p293) target = $region78
                $region75: #{tpu_custom_call.1} parent=70 // loop_body
                  _
                $region76: #{tpu_custom_call.1} parent=70 // loop_footer
                  %s296 = sadd.s32 1, %s292
                $region77: #{tpu_custom_call.1} parent=70 // loop_footer_branch
                  %291 = sbr.rel target = $region73
                $region78: #{tpu_custom_call.1} parent=70 // loop_exit
                  _
                loop: start=0, step=1, limit=1
                $region79: #{tpu_custom_call.1} parent=70 // loop_pre_header
                  _
                $region80: #{tpu_custom_call.1} parent=70 // loop_header
                  %s301 = sphi 0, %s305
                  %p302 = scmp.ge.s32.totalorder %s301, 1
                  %s306 = sphi %s265, %s265
                  %s307 = sphi %s263, %s263
                $region81: #{tpu_custom_call.1} parent=70 // loop_header_branch
                  %304 = sbr.rel (%p302) target = $region85
                $region82: #{tpu_custom_call.1} parent=70 // loop_body
                  %v308 = vld [vmem:[%s306] sm:$0xf]
                  %309 = vst [vmem:[%s307] sm:$0xf] %v308
                  %v310 = vld [vmem:[%s306 + $0x8] sm:$0xf]
                  %311 = vst [vmem:[%s307 + $0x4] sm:$0xf] %v310
                  %v312 = vld [vmem:[%s306 + $0x10] sm:$0xf]
                  %313 = vst [vmem:[%s307 + $0x8] sm:$0xf] %v312
                  %v314 = vld [vmem:[%s306 + $0x18] sm:$0xf]
                  %315 = vst [vmem:[%s307 + $0xc] sm:$0xf] %v314
                $region83: #{tpu_custom_call.1} parent=70 // loop_footer
                  %s305 = sadd.s32 1, %s301
                $region84: #{tpu_custom_call.1} parent=70 // loop_footer_branch
                  %300 = sbr.rel target = $region80
                $region85: #{tpu_custom_call.1} parent=70 // loop_exit
                  _
              $region71: #{tpu_custom_call.1} parent=55 // pred_fallthru
                _
            $region56: #{tpu_custom_call.1} parent=51 // pred_fallthru
              _
            // Predicated region
            $region57: #{tpu_custom_call.1} parent=51 // pred_check
              _
            $region58: #{tpu_custom_call.1} parent=51 // pred_check_branch
              %271 = sbr.rel (0) target = $region60
            $region59: #{tpu_custom_call.1} parent=51 // pred_region
              loop: start=0, step=1, limit=1
              $region61: #{tpu_custom_call.1} parent=59 // loop_pre_header
                _
              $region62: #{tpu_custom_call.1} parent=59 // loop_header
                %s274 = sphi 0, %s278
                %p275 = scmp.ge.s32.totalorder %s274, 1
                %s279 = sphi %s265, %s265
                %s280 = sphi %s263, %s263
              $region63: #{tpu_custom_call.1} parent=59 // loop_header_branch
                %277 = sbr.rel (%p275) target = $region67
              $region64: #{tpu_custom_call.1} parent=59 // loop_body
                %v281 = vld [vmem:[%s279] sm:$0xf]
                %282 = vst [vmem:[%s280] sm:$0xf] %v281
                %v283 = vld [vmem:[%s279 + $0x8] sm:$0xf]
                %284 = vst [vmem:[%s280 + $0x4] sm:$0xf] %v283
                %v285 = vld [vmem:[%s279 + $0x10] sm:$0xf]
                %286 = vst [vmem:[%s280 + $0x8] sm:$0xf] %v285
                %v287 = vld [vmem:[%s279 + $0x18] sm:$0xf]
                %288 = vst [vmem:[%s280 + $0xc] sm:$0xf] %v287
              $region65: #{tpu_custom_call.1} parent=59 // loop_footer
                %s278 = sadd.s32 1, %s274
              $region66: #{tpu_custom_call.1} parent=59 // loop_footer_branch
                %273 = sbr.rel target = $region62
              $region67: #{tpu_custom_call.1} parent=59 // loop_exit
                _
            $region60: #{tpu_custom_call.1} parent=51 // pred_fallthru
              _
          $region52: #{tpu_custom_call.1} parent=47 // pred_fallthru
            _
          %316 = vnop
        $region48: #{tpu_custom_call.1} parent=43 // pred_fallthru
          _
      $region44: #{tpu_custom_call.1} parent=5 // pred_fallthru
        _
      %p317 = scmp.le.s32.totalorder 1, %s18
      %p318 = scmp.lt.s32.totalorder %s18, 3
      %p319 = pnand %p317, %p318
      %p320 = pneg %p319
      // Predicated region
      $region86: #{tpu_custom_call.1} parent=5 // pred_check
        _
      $region87: #{tpu_custom_call.1} parent=5 // pred_check_branch
        %322 = sbr.rel (%p319) target = $region89
      $region88: #{tpu_custom_call.1} parent=5 // pred_region
        %s323 = ssub.s32 %s18, 1
        %s324 = sand.u32 %s31, 1
        %s325 = sand.u32 %s31, 1
        %s326 = smul.addr %s325, 16
        %s327 = scalar_lea.vmem [#allocation3], %s326
        // Predicated region
        $region90: #{tpu_custom_call.1} parent=88 // pred_check
          %p328 = pneg %p44
        $region91: #{tpu_custom_call.1} parent=88 // pred_check_branch
          %330 = sbr.rel (%p328) target = $region93
        $region92: #{tpu_custom_call.1} parent=88 // pred_region
          _
        $region93: #{tpu_custom_call.1} parent=88 // pred_fallthru
          _
        %s331 = sand.u32 %s31, 1
        %s332 = sand.u32 %s31, 1
        %s333 = smul.addr %s332, 16
        %s334 = scalar_lea.vmem [#allocation3], %s333
        %p335 = pneg %p44
        %p336 = pneg %p41
        %p337 = pneg %p65
        %p338 = pneg %p62
        %p339 = pneg %p86
        %p340 = pneg %p83
        %p341 = pneg %p107
        %p342 = pneg %p104
        %p343 = pneg %p128
        %p344 = pneg %p125
        %p345 = pneg %p149
        %p346 = pneg %p146
        %p347 = pneg %p170
        %p348 = pneg %p167
        %p349 = pneg %p191
        %p350 = pneg %p188
        %p351 = pneg %p217
        %p352 = pneg %p214
        %s353 = sand.u32 %s204, 1
        %s354 = scalar_lea.sflag [#allocation5], %s353
        %s355 = sand.u32 %s204, 1
        %s356 = smul.addr %s355, 32
        %s357 = scalar_lea.vmem [#allocation4], %s356
        %v359 = vld [vmem:[%s327] sm:$0xf]
        %v360 = vld [vmem:[%s327 + $0x4] sm:$0xf]
        %v361 = vld [vmem:[%s327 + $0x8] sm:$0xf]
        %v362 = vld [vmem:[%s327 + $0xc] sm:$0xf]
        %v363 = vunpack.c.l.bf16 %v359
        %v364 = vunpack.c.l.bf16 %v360
        %v365 = vunpack.c.l.bf16 %v361
        %v366 = vunpack.c.l.bf16 %v362
        %v367 = vld [vmem:[%s1] sm:$0x3]
        %v368 = vld [vmem:[%s2] sm:$0xf]
        %370 = vset.pattern.permute.xlu0 0
        %371 = vperm.xlu0 %370, %v368
        %v372 = vpop.permute.xlu0 %371
        %v378 = vunpack.c.l.b16 %v359
        %v379 = vunpack.c.l.b16 %v360
        %v380 = vunpack.c.l.b16 %v361
        %v381 = vunpack.c.l.b16 %v362
        %v382 = vpack.c.b16 %v379, %v378
        %v383 = vpack.c.b16 %v381, %v380
        %vm386 = vcmask 261120
        %v388 = vsel %vm386, %v367, 0
        %390 = vmatprep.subr.bf16.mxu0 0
        %391 = vmatpush1.bf16.msra.mxu0 %v382
        %392 = vmatprep.subr.bf16.mxu0 0
        %393 = vmatpush1.bf16.msra.mxu0 %v383
        %394 = vmatprep.subr.bf16.mxu0 0
        %395 = vmatpush1.bf16.msra.mxu0 0
        %396 = vmatprep.subr.bf16.mxu0 0
        %397 = vmatpush1.bf16.msra.mxu0 0
        %398 = vmatprep.subr.bf16.mxu0 0
        %399 = vmatpush1.bf16.msra.mxu0 0
        %400 = vmatprep.subr.bf16.mxu0 0
        %401 = vmatpush1.bf16.msra.mxu0 0
        %402 = vmatprep.subr.bf16.mxu0 0
        %403 = vmatpush1.bf16.msra.mxu0 0
        %404 = vmatprep.subr.bf16.mxu0 0
        %405 = vmatpush1.bf16.msra.mxu0 0
        %406 = vmatprep.subr.bf16.mxu0 0
        %407 = vmatpush1.bf16.msra.mxu0 0
        %408 = vmatprep.subr.bf16.mxu0 0
        %409 = vmatpush1.bf16.msra.mxu0 0
        %410 = vmatprep.subr.bf16.mxu0 0
        %411 = vmatpush1.bf16.msra.mxu0 0
        %412 = vmatprep.subr.bf16.mxu0 0
        %413 = vmatpush1.bf16.msra.mxu0 0
        %414 = vmatprep.subr.bf16.mxu0 0
        %415 = vmatpush1.bf16.msra.mxu0 0
        %416 = vmatprep.subr.bf16.mxu0 0
        %417 = vmatpush1.bf16.msra.mxu0 0
        %418 = vmatprep.subr.bf16.mxu0 0
        %419 = vmatpush1.bf16.msra.mxu0 0
        %420 = vmatprep.subr.bf16.mxu0 0
        %421 = vmatpush1.bf16.msra.mxu0 0
        %422 = vmatprep.mubr.bf16.mxu0 0
        %423 = vmatmul.mubr.bf16.gmra.mrb[0].mxu0 %v388
        %v424 = vpop.f32.mrb[0].mxu0
        %v425 = vadd.f32 %v372, %v424
        %v426 = vpop.f32.mrb[0].mxu0
        %v427 = vpop.f32.mrb[0].mxu0
        %v428 = vpop.f32.mrb[0].mxu0
        %429 = vdwg.mxu0
        %v430 = vld [vmem:[%s3] sm:$0x3]
        %v431 = vld [vmem:[%s4] sm:$0xf]
        %433 = vset.pattern.permute.xlu0 0
        %434 = vperm.xlu0 %433, %v431
        %v435 = vpop.permute.xlu0 %434
        %v438 = vsel %vm386, %v430, 0
        %440 = vmatprep.subr.bf16.mxu0 0
        %441 = vmatpush1.bf16.msra.mxu0 %v382
        %442 = vmatprep.subr.bf16.mxu0 0
        %443 = vmatpush1.bf16.msra.mxu0 %v383
        %444 = vmatprep.subr.bf16.mxu0 0
        %445 = vmatpush1.bf16.msra.mxu0 0
        %446 = vmatprep.subr.bf16.mxu0 0
        %447 = vmatpush1.bf16.msra.mxu0 0
        %448 = vmatprep.subr.bf16.mxu0 0
        %449 = vmatpush1.bf16.msra.mxu0 0
        %450 = vmatprep.subr.bf16.mxu0 0
        %451 = vmatpush1.bf16.msra.mxu0 0
        %452 = vmatprep.subr.bf16.mxu0 0
        %453 = vmatpush1.bf16.msra.mxu0 0
        %454 = vmatprep.subr.bf16.mxu0 0
        %455 = vmatpush1.bf16.msra.mxu0 0
        %456 = vmatprep.subr.bf16.mxu0 0
        %457 = vmatpush1.bf16.msra.mxu0 0
        %458 = vmatprep.subr.bf16.mxu0 0
        %459 = vmatpush1.bf16.msra.mxu0 0
        %460 = vmatprep.subr.bf16.mxu0 0
        %461 = vmatpush1.bf16.msra.mxu0 0
        %462 = vmatprep.subr.bf16.mxu0 0
        %463 = vmatpush1.bf16.msra.mxu0 0
        %464 = vmatprep.subr.bf16.mxu0 0
        %465 = vmatpush1.bf16.msra.mxu0 0
        %466 = vmatprep.subr.bf16.mxu0 0
        %467 = vmatpush1.bf16.msra.mxu0 0
        %468 = vmatprep.subr.bf16.mxu0 0
        %469 = vmatpush1.bf16.msra.mxu0 0
        %470 = vmatprep.subr.bf16.mxu0 0
        %471 = vmatpush1.bf16.msra.mxu0 0
        %472 = vmatprep.mubr.bf16.mxu0 0
        %473 = vmatmul.mubr.bf16.gmra.mrb[0].mxu0 %v438
        %v474 = vpop.f32.mrb[0].mxu0
        %v475 = vadd.f32 %v435, %v474
        %v476 = vpop.f32.mrb[0].mxu0
        %v477 = vpop.f32.mrb[0].mxu0
        %v478 = vpop.f32.mrb[0].mxu0
        %479 = vdwg.mxu0
        %v480 = vld [vmem:[%s5] sm:$0xf]
        %v481 = vld [vmem:[%s5 + $0x4] sm:$0xf]
        %v482 = vld [vmem:[%s5 + $0x8] sm:$0xf]
        %v483 = vld [vmem:[%s5 + $0xc] sm:$0xf]
        %v484 = vld [vmem:[%s6] sm:$0xff]
        %v485 = vld [vmem:[%s6 + $0x8] sm:$0xff]
        %v486 = vld [vmem:[%s6 + $0x10] sm:$0xff]
        %v487 = vld [vmem:[%s6 + $0x18] sm:$0xff]
        %489 = vset.pattern.permute.xlu0 0
        %490 = vperm.xlu0 %489, %v484
        %v491 = vpop.permute.xlu0 %490
        %494 = vset.pattern.permute.xlu0 0
        %495 = vperm.xlu0 %494, %v485
        %v496 = vpop.permute.xlu0 %495
        %499 = vset.pattern.permute.xlu0 0
        %500 = vperm.xlu0 %499, %v486
        %v501 = vpop.permute.xlu0 %500
        %504 = vset.pattern.permute.xlu0 0
        %505 = vperm.xlu0 %504, %v487
        %v506 = vpop.permute.xlu0 %505
        %v512 = vunpack.c.l.b16 %v480
        %v513 = vunpack.c.l.b16 %v481
        %v514 = vunpack.c.l.b16 %v482
        %v515 = vunpack.c.l.b16 %v483
        %v516 = vpack.c.b16 %v513, %v512
        %v517 = vpack.c.b16 %v515, %v514
        %v519 = vsel %vm386, %v516, 0
        %v522 = vsel %vm386, %v517, 0
        %524 = vmatprep.subr.bf16.mxu0 0
        %525 = vmatpush1.bf16.msra.mxu0 %v382
        %526 = vmatprep.subr.bf16.mxu0 0
        %527 = vmatpush1.bf16.msra.mxu0 %v383
        %528 = vmatprep.subr.bf16.mxu0 0
        %529 = vmatpush1.bf16.msra.mxu0 0
        %530 = vmatprep.subr.bf16.mxu0 0
        %531 = vmatpush1.bf16.msra.mxu0 0
        %532 = vmatprep.subr.bf16.mxu0 0
        %533 = vmatpush1.bf16.msra.mxu0 0
        %534 = vmatprep.subr.bf16.mxu0 0
        %535 = vmatpush1.bf16.msra.mxu0 0
        %536 = vmatprep.subr.bf16.mxu0 0
        %537 = vmatpush1.bf16.msra.mxu0 0
        %538 = vmatprep.subr.bf16.mxu0 0
        %539 = vmatpush1.bf16.msra.mxu0 0
        %540 = vmatprep.subr.bf16.mxu0 0
        %541 = vmatpush1.bf16.msra.mxu0 0
        %542 = vmatprep.subr.bf16.mxu0 0
        %543 = vmatpush1.bf16.msra.mxu0 0
        %544 = vmatprep.subr.bf16.mxu0 0
        %545 = vmatpush1.bf16.msra.mxu0 0
        %546 = vmatprep.subr.bf16.mxu0 0
        %547 = vmatpush1.bf16.msra.mxu0 0
        %548 = vmatprep.subr.bf16.mxu0 0
        %549 = vmatpush1.bf16.msra.mxu0 0
        %550 = vmatprep.subr.bf16.mxu0 0
        %551 = vmatpush1.bf16.msra.mxu0 0
        %552 = vmatprep.subr.bf16.mxu0 0
        %553 = vmatpush1.bf16.msra.mxu0 0
        %554 = vmatprep.subr.bf16.mxu0 0
        %555 = vmatpush1.bf16.msra.mxu0 0
        %556 = vmatprep.mubr.bf16.mxu0 0
        %557 = vmatmul.mubr.bf16.gmra.mrb[0].mxu0 %v519
        %v558 = vpop.f32.mrb[0].mxu0
        %v559 = vadd.f32 %v491, %v558
        %v560 = vpop.f32.mrb[0].mxu0
        %v561 = vpop.f32.mrb[0].mxu0
        %v562 = vadd.f32 %v496, %v561
        %v563 = vpop.f32.mrb[0].mxu0
        %564 = vmatprep.mubr.bf16.mxu0 0
        %565 = vmatmul.mubr.bf16.gmra.mrb[0].mxu0 %v522
        %v566 = vpop.f32.mrb[0].mxu0
        %v567 = vadd.f32 %v501, %v566
        %v568 = vpop.f32.mrb[0].mxu0
        %v569 = vpop.f32.mrb[0].mxu0
        %v570 = vadd.f32 %v506, %v569
        %v571 = vpop.f32.mrb[0].mxu0
        %572 = vdwg.mxu0
        %573 = vxpose.xlu0.b32.start [1/16] %v425, 128
        %574 = vxpose.xlu0.b32.cont [2/16] 0.0, 128
        %575 = vxpose.xlu0.b32.cont [3/16] 0.0, 128
        %576 = vxpose.xlu0.b32.cont [4/16] 0.0, 128
        %577 = vxpose.xlu0.b32.cont [5/16] 0.0, 128
        %578 = vxpose.xlu0.b32.cont [6/16] 0.0, 128
        %579 = vxpose.xlu0.b32.cont [7/16] 0.0, 128
        %580 = vxpose.xlu0.b32.cont [8/16] 0.0, 128
        %581 = vxpose.xlu0.b32.cont [9/16] 0.0, 128
        %582 = vxpose.xlu0.b32.cont [10/16] 0.0, 128
        %583 = vxpose.xlu0.b32.cont [11/16] 0.0, 128
        %584 = vxpose.xlu0.b32.cont [12/16] 0.0, 128
        %585 = vxpose.xlu0.b32.cont [13/16] 0.0, 128
        %586 = vxpose.xlu0.b32.cont [14/16] 0.0, 128
        %587 = vxpose.xlu0.b32.cont [15/16] 0.0, 128
        %588 = vxpose.xlu0.b32.end [16/16] 0.0, 128
        %v589 = vpop.trf.xlu0
        %v590 = vpop.trf.xlu0
        %v591 = vpop.trf.xlu0
        %v592 = vpop.trf.xlu0
        %v593 = vpop.trf.xlu0
        %v594 = vpop.trf.xlu0
        %v595 = vpop.trf.xlu0
        %v596 = vpop.trf.xlu0
        %v597 = vpop.trf.xlu0
        %v598 = vpop.trf.xlu0
        %v599 = vpop.trf.xlu0
        %v600 = vpop.trf.xlu0
        %v601 = vpop.trf.xlu0
        %v602 = vpop.trf.xlu0
        %v603 = vpop.trf.xlu0
        %v604 = vpop.trf.xlu0
        %vm605 = vcmask 31744
        %v607 = vsel %vm605, %v589, 0
        %v610 = vsel %vm605, %v590, 0
        %vm612 = vcmask 1043456
        %v614 = vsel %vm612, %v475, 0
        %616 = vmatprep.subr.mxu0 0.0
        %617 = vmatpush1.msra.mxu0 %v614
        %618 = vmatprep.subr.mxu0 0.0
        %619 = vmatpush1.msra.mxu0 0.0
        %620 = vmatprep.subr.mxu0 0.0
        %621 = vmatpush1.msra.mxu0 0.0
        %622 = vmatprep.subr.mxu0 0.0
        %623 = vmatpush1.msra.mxu0 0.0
        %624 = vmatprep.subr.mxu0 0.0
        %625 = vmatpush1.msra.mxu0 0.0
        %626 = vmatprep.subr.mxu0 0.0
        %627 = vmatpush1.msra.mxu0 0.0
        %628 = vmatprep.subr.mxu0 0.0
        %629 = vmatpush1.msra.mxu0 0.0
        %630 = vmatprep.subr.mxu0 0.0
        %631 = vmatpush1.msra.mxu0 0.0
        %632 = vmatprep.subr.mxu0 0.0
        %633 = vmatpush1.msra.mxu0 0.0
        %634 = vmatprep.subr.mxu0 0.0
        %635 = vmatpush1.msra.mxu0 0.0
        %636 = vmatprep.subr.mxu0 0.0
        %637 = vmatpush1.msra.mxu0 0.0
        %638 = vmatprep.subr.mxu0 0.0
        %639 = vmatpush1.msra.mxu0 0.0
        %640 = vmatprep.subr.mxu0 0.0
        %641 = vmatpush1.msra.mxu0 0.0
        %642 = vmatprep.subr.mxu0 0.0
        %643 = vmatpush1.msra.mxu0 0.0
        %644 = vmatprep.subr.mxu0 0.0
        %645 = vmatpush1.msra.mxu0 0.0
        %646 = vmatprep.subr.mxu0 0.0
        %647 = vmatpush1.msra.mxu0 0.0
        %648 = vmatprep.subr.mxu0 0.0
        %649 = vmatpush1.msra.mxu0 0.0
        %650 = vmatprep.subr.mxu0 0.0
        %651 = vmatpush1.msra.mxu0 0.0
        %652 = vmatprep.subr.mxu0 0.0
        %653 = vmatpush1.msra.mxu0 0.0
        %654 = vmatprep.subr.mxu0 0.0
        %655 = vmatpush1.msra.mxu0 0.0
        %656 = vmatprep.subr.mxu0 0.0
        %657 = vmatpush1.msra.mxu0 0.0
        %658 = vmatprep.subr.mxu0 0.0
        %659 = vmatpush1.msra.mxu0 0.0
        %660 = vmatprep.subr.mxu0 0.0
        %661 = vmatpush1.msra.mxu0 0.0
        %662 = vmatprep.subr.mxu0 0.0
        %663 = vmatpush1.msra.mxu0 0.0
        %664 = vmatprep.subr.mxu0 0.0
        %665 = vmatpush1.msra.mxu0 0.0
        %666 = vmatprep.subr.mxu0 0.0
        %667 = vmatpush1.msra.mxu0 0.0
        %668 = vmatprep.subr.mxu0 0.0
        %669 = vmatpush1.msra.mxu0 0.0
        %670 = vmatprep.subr.mxu0 0.0
        %671 = vmatpush1.msra.mxu0 0.0
        %672 = vmatprep.subr.mxu0 0.0
        %673 = vmatpush1.msra.mxu0 0.0
        %674 = vmatprep.subr.mxu0 0.0
        %675 = vmatpush1.msra.mxu0 0.0
        %676 = vmatprep.subr.mxu0 0.0
        %677 = vmatpush1.msra.mxu0 0.0
        %678 = vmatprep.subr.mxu0 0.0
        %679 = vmatpush1.msra.mxu0 0.0
        %680 = vmatprep.mubr.f32.mxu0 0.0
        %681 = vmatmul.mubr.f32.gmra.mrb[0].mxu0 %v607
        %v682 = vpop.f32.mrb[0].mxu0
        %v683 = vadd.f32 0.0, %v682
        %v684 = vpop.f32.mrb[0].mxu0
        %685 = vmatprep.mubr.f32.mxu0 0.0
        %686 = vmatmul.mubr.f32.gmra.mrb[0].mxu0 %v610
        %v687 = vpop.f32.mrb[0].mxu0
        %v688 = vadd.f32 0.0, %v687
        %v689 = vpop.f32.mrb[0].mxu0
        %690 = vdwg.mxu0
        %vm691 = vcmask 130048
        %v692 = vsel %vm691, %v683, -inf
        %693 = vmax.xlane.f32.xlu0 %v692
        %v694 = vpop.xlane.xlu0 %693
        %v695 = vsel %vm691, %v688, -inf
        %696 = vmax.xlane.f32.xlu0 %v695
        %v697 = vpop.xlane.xlu0 %696
        %v698 = vsub.f32 %v683, %v694
        %v699 = vsub.f32 %v688, %v697
        %v700 = vmul.f32 %v698, 1.442695
        %v701 = vpow.pop %v700
        %v702 = vmul.f32 %v699, 1.442695
        %v703 = vpow.pop %v702
        %v704 = vsel %vm691, %v701, 0.0
        %705 = vadd.xlane.f32.xlu0 %v704
        %v706 = vpop.xlane.xlu0 %705
        %v707 = vsel %vm691, %v703, 0.0
        %708 = vadd.xlane.f32.xlu0 %v707
        %v709 = vpop.xlane.xlu0 %708
        %v710 = vrcp.pop %v706
        %v711 = vrcp.pop %v709
        %v712 = vmul.f32 %v701, %v710
        %v713 = vmul.f32 %v703, %v711
        %v715 = vsel %vm691, %v559, 0
        %v718 = vsel %vm691, %v562, 0
        %v721 = vsel %vm691, %v567, 0
        %v724 = vsel %vm691, %v570, 0
        %v727 = vsel %vm691, %v712, 0
        %v730 = vsel %vm691, %v713, 0
        %732 = vmatprep.subr.mxu0 0.0
        %733 = vmatpush1.xpose.msra.mxu0 %v727
        %734 = vmatprep.subr.mxu0 0.0
        %735 = vmatpush1.xpose.msra.mxu0 %v730
        %736 = vmatprep.subr.mxu0 0.0
        %737 = vmatpush1.xpose.msra.mxu0 0.0
        %738 = vmatprep.subr.mxu0 0.0
        %739 = vmatpush1.xpose.msra.mxu0 0.0
        %740 = vmatprep.subr.mxu0 0.0
        %741 = vmatpush1.xpose.msra.mxu0 0.0
        %742 = vmatprep.subr.mxu0 0.0
        %743 = vmatpush1.xpose.msra.mxu0 0.0
        %744 = vmatprep.subr.mxu0 0.0
        %745 = vmatpush1.xpose.msra.mxu0 0.0
        %746 = vmatprep.subr.mxu0 0.0
        %747 = vmatpush1.xpose.msra.mxu0 0.0
        %748 = vmatprep.subr.mxu0 0.0
        %749 = vmatpush1.xpose.msra.mxu0 0.0
        %750 = vmatprep.subr.mxu0 0.0
        %751 = vmatpush1.xpose.msra.mxu0 0.0
        %752 = vmatprep.subr.mxu0 0.0
        %753 = vmatpush1.xpose.msra.mxu0 0.0
        %754 = vmatprep.subr.mxu0 0.0
        %755 = vmatpush1.xpose.msra.mxu0 0.0
        %756 = vmatprep.subr.mxu0 0.0
        %757 = vmatpush1.xpose.msra.mxu0 0.0
        %758 = vmatprep.subr.mxu0 0.0
        %759 = vmatpush1.xpose.msra.mxu0 0.0
        %760 = vmatprep.subr.mxu0 0.0
        %761 = vmatpush1.xpose.msra.mxu0 0.0
        %762 = vmatprep.subr.mxu0 0.0
        %763 = vmatpush1.xpose.msra.mxu0 0.0
        %764 = vmatprep.subr.mxu0 0.0
        %765 = vmatpush1.xpose.msra.mxu0 0.0
        %766 = vmatprep.subr.mxu0 0.0
        %767 = vmatpush1.xpose.msra.mxu0 0.0
        %768 = vmatprep.subr.mxu0 0.0
        %769 = vmatpush1.xpose.msra.mxu0 0.0
        %770 = vmatprep.subr.mxu0 0.0
        %771 = vmatpush1.xpose.msra.mxu0 0.0
        %772 = vmatprep.subr.mxu0 0.0
        %773 = vmatpush1.xpose.msra.mxu0 0.0
        %774 = vmatprep.subr.mxu0 0.0
        %775 = vmatpush1.xpose.msra.mxu0 0.0
        %776 = vmatprep.subr.mxu0 0.0
        %777 = vmatpush1.xpose.msra.mxu0 0.0
        %778 = vmatprep.subr.mxu0 0.0
        %779 = vmatpush1.xpose.msra.mxu0 0.0
        %780 = vmatprep.subr.mxu0 0.0
        %781 = vmatpush1.xpose.msra.mxu0 0.0
        %782 = vmatprep.subr.mxu0 0.0
        %783 = vmatpush1.xpose.msra.mxu0 0.0
        %784 = vmatprep.subr.mxu0 0.0
        %785 = vmatpush1.xpose.msra.mxu0 0.0
        %786 = vmatprep.subr.mxu0 0.0
        %787 = vmatpush1.xpose.msra.mxu0 0.0
        %788 = vmatprep.subr.mxu0 0.0
        %789 = vmatpush1.xpose.msra.mxu0 0.0
        %790 = vmatprep.subr.mxu0 0.0
        %791 = vmatpush1.xpose.msra.mxu0 0.0
        %792 = vmatprep.subr.mxu0 0.0
        %793 = vmatpush1.xpose.msra.mxu0 0.0
        %794 = vmatprep.subr.mxu0 0.0
        %795 = vmatpush1.xpose.msra.mxu0 0.0
        %796 = vmatprep.mubr.f32.mxu0 0.0
        %797 = vmatmul.mubr.f32.gmra.mrb[0].mxu0 %v715
        %v798 = vpop.f32.mrb[0].mxu0
        %v799 = vadd.f32 0.0, %v798
        %v800 = vpop.f32.mrb[0].mxu0
        %801 = vmatprep.mubr.f32.mxu0 0.0
        %802 = vmatmul.mubr.f32.gmra.mrb[0].mxu0 %v718
        %v803 = vpop.f32.mrb[0].mxu0
        %v804 = vadd.f32 0.0, %v803
        %v805 = vpop.f32.mrb[0].mxu0
        %806 = vmatprep.mubr.f32.mxu0 0.0
        %807 = vmatmul.mubr.f32.gmra.mrb[0].mxu0 %v721
        %v808 = vpop.f32.mrb[0].mxu0
        %v809 = vadd.f32 0.0, %v808
        %v810 = vpop.f32.mrb[0].mxu0
        %811 = vmatprep.mubr.f32.mxu0 0.0
        %812 = vmatmul.mubr.f32.gmra.mrb[0].mxu0 %v724
        %v813 = vpop.f32.mrb[0].mxu0
        %v814 = vadd.f32 0.0, %v813
        %v815 = vpop.f32.mrb[0].mxu0
        %816 = vdwg.mxu0
        %817 = vrot.lane.b32.xlu0 %v475, 112
        %v818 = vpop.permute.xlu0 %817
        %v820 = vsel %vm605, %v591, 0
        %v823 = vsel %vm605, %v592, 0
        %v825 = vsel %vm612, %v818, 0
        %827 = vmatprep.subr.mxu0 0.0
        %828 = vmatpush1.msra.mxu0 %v825
        %829 = vmatprep.subr.mxu0 0.0
        %830 = vmatpush1.msra.mxu0 0.0
        %831 = vmatprep.subr.mxu0 0.0
        %832 = vmatpush1.msra.mxu0 0.0
        %833 = vmatprep.subr.mxu0 0.0
        %834 = vmatpush1.msra.mxu0 0.0
        %835 = vmatprep.subr.mxu0 0.0
        %836 = vmatpush1.msra.mxu0 0.0
        %837 = vmatprep.subr.mxu0 0.0
        %838 = vmatpush1.msra.mxu0 0.0
        %839 = vmatprep.subr.mxu0 0.0
        %840 = vmatpush1.msra.mxu0 0.0
        %841 = vmatprep.subr.mxu0 0.0
        %842 = vmatpush1.msra.mxu0 0.0
        %843 = vmatprep.subr.mxu0 0.0
        %844 = vmatpush1.msra.mxu0 0.0
        %845 = vmatprep.subr.mxu0 0.0
        %846 = vmatpush1.msra.mxu0 0.0
        %847 = vmatprep.subr.mxu0 0.0
        %848 = vmatpush1.msra.mxu0 0.0
        %849 = vmatprep.subr.mxu0 0.0
        %850 = vmatpush1.msra.mxu0 0.0
        %851 = vmatprep.subr.mxu0 0.0
        %852 = vmatpush1.msra.mxu0 0.0
        %853 = vmatprep.subr.mxu0 0.0
        %854 = vmatpush1.msra.mxu0 0.0
        %855 = vmatprep.subr.mxu0 0.0
        %856 = vmatpush1.msra.mxu0 0.0
        %857 = vmatprep.subr.mxu0 0.0
        %858 = vmatpush1.msra.mxu0 0.0
        %859 = vmatprep.subr.mxu0 0.0
        %860 = vmatpush1.msra.mxu0 0.0
        %861 = vmatprep.subr.mxu0 0.0
        %862 = vmatpush1.msra.mxu0 0.0
        %863 = vmatprep.subr.mxu0 0.0
        %864 = vmatpush1.msra.mxu0 0.0
        %865 = vmatprep.subr.mxu0 0.0
        %866 = vmatpush1.msra.mxu0 0.0
        %867 = vmatprep.subr.mxu0 0.0
        %868 = vmatpush1.msra.mxu0 0.0
        %869 = vmatprep.subr.mxu0 0.0
        %870 = vmatpush1.msra.mxu0 0.0
        %871 = vmatprep.subr.mxu0 0.0
        %872 = vmatpush1.msra.mxu0 0.0
        %873 = vmatprep.subr.mxu0 0.0
        %874 = vmatpush1.msra.mxu0 0.0
        %875 = vmatprep.subr.mxu0 0.0
        %876 = vmatpush1.msra.mxu0 0.0
        %877 = vmatprep.subr.mxu0 0.0
        %878 = vmatpush1.msra.mxu0 0.0
        %879 = vmatprep.subr.mxu0 0.0
        %880 = vmatpush1.msra.mxu0 0.0
        %881 = vmatprep.subr.mxu0 0.0
        %882 = vmatpush1.msra.mxu0 0.0
        %883 = vmatprep.subr.mxu0 0.0
        %884 = vmatpush1.msra.mxu0 0.0
        %885 = vmatprep.subr.mxu0 0.0
        %886 = vmatpush1.msra.mxu0 0.0
        %887 = vmatprep.subr.mxu0 0.0
        %888 = vmatpush1.msra.mxu0 0.0
        %889 = vmatprep.subr.mxu0 0.0
        %890 = vmatpush1.msra.mxu0 0.0
        %891 = vmatprep.mubr.f32.mxu0 0.0
        %892 = vmatmul.mubr.f32.gmra.mrb[0].mxu0 %v820
        %v893 = vpop.f32.mrb[0].mxu0
        %v894 = vadd.f32 0.0, %v893
        %v895 = vpop.f32.mrb[0].mxu0
        %896 = vmatprep.mubr.f32.mxu0 0.0
        %897 = vmatmul.mubr.f32.gmra.mrb[0].mxu0 %v823
        %v898 = vpop.f32.mrb[0].mxu0
        %v899 = vadd.f32 0.0, %v898
        %v900 = vpop.f32.mrb[0].mxu0
        %901 = vdwg.mxu0
        %v902 = vsel %vm691, %v894, -inf
        %903 = vmax.xlane.f32.xlu0 %v902
        %v904 = vpop.xlane.xlu0 %903
        %v905 = vsel %vm691, %v899, -inf
        %906 = vmax.xlane.f32.xlu0 %v905
        %v907 = vpop.xlane.xlu0 %906
        %v908 = vsub.f32 %v894, %v904
        %v909 = vsub.f32 %v899, %v907
        %v910 = vmul.f32 %v908, 1.442695
        %v911 = vpow.pop %v910
        %v912 = vmul.f32 %v909, 1.442695
        %v913 = vpow.pop %v912
        %v914 = vsel %vm691, %v911, 0.0
        %915 = vadd.xlane.f32.xlu0 %v914
        %v916 = vpop.xlane.xlu0 %915
        %v917 = vsel %vm691, %v913, 0.0
        %918 = vadd.xlane.f32.xlu0 %v917
        %v919 = vpop.xlane.xlu0 %918
        %v920 = vrcp.pop %v916
        %v921 = vrcp.pop %v919
        %v922 = vmul.f32 %v911, %v920
        %v923 = vmul.f32 %v913, %v921
        %924 = vrot.lane.b32.xlu0 %v559, 112
        %v925 = vpop.permute.xlu0 %924
        %926 = vrot.lane.b32.xlu0 %v562, 112
        %v927 = vpop.permute.xlu0 %926
        %928 = vrot.lane.b32.xlu0 %v567, 112
        %v929 = vpop.permute.xlu0 %928
        %930 = vrot.lane.b32.xlu0 %v570, 112
        %v931 = vpop.permute.xlu0 %930
        %v932 = vsel %vm691, %v925, 0
        %v934 = vsel %vm691, %v927, 0
        %v936 = vsel %vm691, %v929, 0
        %v938 = vsel %vm691, %v931, 0
        %v941 = vsel %vm691, %v922, 0
        %v944 = vsel %vm691, %v923, 0
        %946 = vmatprep.subr.mxu0 0.0
        %947 = vmatpush1.xpose.msra.mxu0 %v941
        %948 = vmatprep.subr.mxu0 0.0
        %949 = vmatpush1.xpose.msra.mxu0 %v944
        %950 = vmatprep.subr.mxu0 0.0
        %951 = vmatpush1.xpose.msra.mxu0 0.0
        %952 = vmatprep.subr.mxu0 0.0
        %953 = vmatpush1.xpose.msra.mxu0 0.0
        %954 = vmatprep.subr.mxu0 0.0
        %955 = vmatpush1.xpose.msra.mxu0 0.0
        %956 = vmatprep.subr.mxu0 0.0
        %957 = vmatpush1.xpose.msra.mxu0 0.0
        %958 = vmatprep.subr.mxu0 0.0
        %959 = vmatpush1.xpose.msra.mxu0 0.0
        %960 = vmatprep.subr.mxu0 0.0
        %961 = vmatpush1.xpose.msra.mxu0 0.0
        %962 = vmatprep.subr.mxu0 0.0
        %963 = vmatpush1.xpose.msra.mxu0 0.0
        %964 = vmatprep.subr.mxu0 0.0
        %965 = vmatpush1.xpose.msra.mxu0 0.0
        %966 = vmatprep.subr.mxu0 0.0
        %967 = vmatpush1.xpose.msra.mxu0 0.0
        %968 = vmatprep.subr.mxu0 0.0
        %969 = vmatpush1.xpose.msra.mxu0 0.0
        %970 = vmatprep.subr.mxu0 0.0
        %971 = vmatpush1.xpose.msra.mxu0 0.0
        %972 = vmatprep.subr.mxu0 0.0
        %973 = vmatpush1.xpose.msra.mxu0 0.0
        %974 = vmatprep.subr.mxu0 0.0
        %975 = vmatpush1.xpose.msra.mxu0 0.0
        %976 = vmatprep.subr.mxu0 0.0
        %977 = vmatpush1.xpose.msra.mxu0 0.0
        %978 = vmatprep.subr.mxu0 0.0
        %979 = vmatpush1.xpose.msra.mxu0 0.0
        %980 = vmatprep.subr.mxu0 0.0
        %981 = vmatpush1.xpose.msra.mxu0 0.0
        %982 = vmatprep.subr.mxu0 0.0
        %983 = vmatpush1.xpose.msra.mxu0 0.0
        %984 = vmatprep.subr.mxu0 0.0
        %985 = vmatpush1.xpose.msra.mxu0 0.0
        %986 = vmatprep.subr.mxu0 0.0
        %987 = vmatpush1.xpose.msra.mxu0 0.0
        %988 = vmatprep.subr.mxu0 0.0
        %989 = vmatpush1.xpose.msra.mxu0 0.0
        %990 = vmatprep.subr.mxu0 0.0
        %991 = vmatpush1.xpose.msra.mxu0 0.0
        %992 = vmatprep.subr.mxu0 0.0
        %993 = vmatpush1.xpose.msra.mxu0 0.0
        %994 = vmatprep.subr.mxu0 0.0
        %995 = vmatpush1.xpose.msra.mxu0 0.0
        %996 = vmatprep.subr.mxu0 0.0
        %997 = vmatpush1.xpose.msra.mxu0 0.0
        %998 = vmatprep.subr.mxu0 0.0
        %999 = vmatpush1.xpose.msra.mxu0 0.0
        %1000 = vmatprep.subr.mxu0 0.0
        %1001 = vmatpush1.xpose.msra.mxu0 0.0
        %1002 = vmatprep.subr.mxu0 0.0
        %1003 = vmatpush1.xpose.msra.mxu0 0.0
        %1004 = vmatprep.subr.mxu0 0.0
        %1005 = vmatpush1.xpose.msra.mxu0 0.0
        %1006 = vmatprep.subr.mxu0 0.0
        %1007 = vmatpush1.xpose.msra.mxu0 0.0
        %1008 = vmatprep.subr.mxu0 0.0
        %1009 = vmatpush1.xpose.msra.mxu0 0.0
        %1010 = vmatprep.mubr.f32.mxu0 0.0
        %1011 = vmatmul.mubr.f32.gmra.mrb[0].mxu0 %v932
        %v1012 = vpop.f32.mrb[0].mxu0
        %v1013 = vadd.f32 0.0, %v1012
        %v1014 = vpop.f32.mrb[0].mxu0
        %1015 = vmatprep.mubr.f32.mxu0 0.0
        %1016 = vmatmul.mubr.f32.gmra.mrb[0].mxu0 %v934
        %v1017 = vpop.f32.mrb[0].mxu0
        %v1018 = vadd.f32 0.0, %v1017
        %v1019 = vpop.f32.mrb[0].mxu0
        %1020 = vmatprep.mubr.f32.mxu0 0.0
        %1021 = vmatmul.mubr.f32.gmra.mrb[0].mxu0 %v936
        %v1022 = vpop.f32.mrb[0].mxu0
        %v1023 = vadd.f32 0.0, %v1022
        %v1024 = vpop.f32.mrb[0].mxu0
        %1025 = vmatprep.mubr.f32.mxu0 0.0
        %1026 = vmatmul.mubr.f32.gmra.mrb[0].mxu0 %v938
        %v1027 = vpop.f32.mrb[0].mxu0
        %v1028 = vadd.f32 0.0, %v1027
        %v1029 = vpop.f32.mrb[0].mxu0
        %1030 = vdwg.mxu0
        %1031 = vrot.lane.b32.xlu0 %v475, 96
        %v1032 = vpop.permute.xlu0 %1031
        %v1034 = vsel %vm605, %v593, 0
        %v1037 = vsel %vm605, %v594, 0
        %v1039 = vsel %vm612, %v1032, 0
        %1041 = vmatprep.subr.mxu0 0.0
        %1042 = vmatpush1.msra.mxu0 %v1039
        %1043 = vmatprep.subr.mxu0 0.0
        %1044 = vmatpush1.msra.mxu0 0.0
        %1045 = vmatprep.subr.mxu0 0.0
        %1046 = vmatpush1.msra.mxu0 0.0
        %1047 = vmatprep.subr.mxu0 0.0
        %1048 = vmatpush1.msra.mxu0 0.0
        %1049 = vmatprep.subr.mxu0 0.0
        %1050 = vmatpush1.msra.mxu0 0.0
        %1051 = vmatprep.subr.mxu0 0.0
        %1052 = vmatpush1.msra.mxu0 0.0
        %1053 = vmatprep.subr.mxu0 0.0
        %1054 = vmatpush1.msra.mxu0 0.0
        %1055 = vmatprep.subr.mxu0 0.0
        %1056 = vmatpush1.msra.mxu0 0.0
        %1057 = vmatprep.subr.mxu0 0.0
        %1058 = vmatpush1.msra.mxu0 0.0
        %1059 = vmatprep.subr.mxu0 0.0
        %1060 = vmatpush1.msra.mxu0 0.0
        %1061 = vmatprep.subr.mxu0 0.0
        %1062 = vmatpush1.msra.mxu0 0.0
        %1063 = vmatprep.subr.mxu0 0.0
        %1064 = vmatpush1.msra.mxu0 0.0
        %1065 = vmatprep.subr.mxu0 0.0
        %1066 = vmatpush1.msra.mxu0 0.0
        %1067 = vmatprep.subr.mxu0 0.0
        %1068 = vmatpush1.msra.mxu0 0.0
        %1069 = vmatprep.subr.mxu0 0.0
        %1070 = vmatpush1.msra.mxu0 0.0
        %1071 = vmatprep.subr.mxu0 0.0
        %1072 = vmatpush1.msra.mxu0 0.0
        %1073 = vmatprep.subr.mxu0 0.0
        %1074 = vmatpush1.msra.mxu0 0.0
        %1075 = vmatprep.subr.mxu0 0.0
        %1076 = vmatpush1.msra.mxu0 0.0
        %1077 = vmatprep.subr.mxu0 0.0
        %1078 = vmatpush1.msra.mxu0 0.0
        %1079 = vmatprep.subr.mxu0 0.0
        %1080 = vmatpush1.msra.mxu0 0.0
        %1081 = vmatprep.subr.mxu0 0.0
        %1082 = vmatpush1.msra.mxu0 0.0
        %1083 = vmatprep.subr.mxu0 0.0
        %1084 = vmatpush1.msra.mxu0 0.0
        %1085 = vmatprep.subr.mxu0 0.0
        %1086 = vmatpush1.msra.mxu0 0.0
        %1087 = vmatprep.subr.mxu0 0.0
        %1088 = vmatpush1.msra.mxu0 0.0
        %1089 = vmatprep.subr.mxu0 0.0
        %1090 = vmatpush1.msra.mxu0 0.0
        %1091 = vmatprep.subr.mxu0 0.0
        %1092 = vmatpush1.msra.mxu0 0.0
        %1093 = vmatprep.subr.mxu0 0.0
        %1094 = vmatpush1.msra.mxu0 0.0
        %1095 = vmatprep.subr.mxu0 0.0
        %1096 = vmatpush1.msra.mxu0 0.0
        %1097 = vmatprep.subr.mxu0 0.0
        %1098 = vmatpush1.msra.mxu0 0.0
        %1099 = vmatprep.subr.mxu0 0.0
        %1100 = vmatpush1.msra.mxu0 0.0
        %1101 = vmatprep.subr.mxu0 0.0
        %1102 = vmatpush1.msra.mxu0 0.0
        %1103 = vmatprep.subr.mxu0 0.0
        %1104 = vmatpush1.msra.mxu0 0.0
        %1105 = vmatprep.mubr.f32.mxu0 0.0
        %1106 = vmatmul.mubr.f32.gmra.mrb[0].mxu0 %v1034
        %v1107 = vpop.f32.mrb[0].mxu0
        %v1108 = vadd.f32 0.0, %v1107
        %v1109 = vpop.f32.mrb[0].mxu0
        %1110 = vmatprep.mubr.f32.mxu0 0.0
        %1111 = vmatmul.mubr.f32.gmra.mrb[0].mxu0 %v1037
        %v1112 = vpop.f32.mrb[0].mxu0
        %v1113 = vadd.f32 0.0, %v1112
        %v1114 = vpop.f32.mrb[0].mxu0
        %1115 = vdwg.mxu0
        %v1116 = vsel %vm691, %v1108, -inf
        %1117 = vmax.xlane.f32.xlu0 %v1116
        %v1118 = vpop.xlane.xlu0 %1117
        %v1119 = vsel %vm691, %v1113, -inf
        %1120 = vmax.xlane.f32.xlu0 %v1119
        %v1121 = vpop.xlane.xlu0 %1120
        %v1122 = vsub.f32 %v1108, %v1118
        %v1123 = vsub.f32 %v1113, %v1121
        %v1124 = vmul.f32 %v1122, 1.442695
        %v1125 = vpow.pop %v1124
        %v1126 = vmul.f32 %v1123, 1.442695
        %v1127 = vpow.pop %v1126
        %v1128 = vsel %vm691, %v1125, 0.0
        %1129 = vadd.xlane.f32.xlu0 %v1128
        %v1130 = vpop.xlane.xlu0 %1129
        %v1131 = vsel %vm691, %v1127, 0.0
        %1132 = vadd.xlane.f32.xlu0 %v1131
        %v1133 = vpop.xlane.xlu0 %1132
        %v1134 = vrcp.pop %v1130
        %v1135 = vrcp.pop %v1133
        %v1136 = vmul.f32 %v1125, %v1134
        %v1137 = vmul.f32 %v1127, %v1135
        %1138 = vrot.lane.b32.xlu0 %v559, 96
        %v1139 = vpop.permute.xlu0 %1138
        %1140 = vrot.lane.b32.xlu0 %v562, 96
        %v1141 = vpop.permute.xlu0 %1140
        %1142 = vrot.lane.b32.xlu0 %v567, 96
        %v1143 = vpop.permute.xlu0 %1142
        %1144 = vrot.lane.b32.xlu0 %v570, 96
        %v1145 = vpop.permute.xlu0 %1144
        %v1146 = vsel %vm691, %v1139, 0
        %v1148 = vsel %vm691, %v1141, 0
        %v1150 = vsel %vm691, %v1143, 0
        %v1152 = vsel %vm691, %v1145, 0
        %v1155 = vsel %vm691, %v1136, 0
        %v1158 = vsel %vm691, %v1137, 0
        %1160 = vmatprep.subr.mxu0 0.0
        %1161 = vmatpush1.xpose.msra.mxu0 %v1155
        %1162 = vmatprep.subr.mxu0 0.0
        %1163 = vmatpush1.xpose.msra.mxu0 %v1158
        %1164 = vmatprep.subr.mxu0 0.0
        %1165 = vmatpush1.xpose.msra.mxu0 0.0
        %1166 = vmatprep.subr.mxu0 0.0
        %1167 = vmatpush1.xpose.msra.mxu0 0.0
        %1168 = vmatprep.subr.mxu0 0.0
        %1169 = vmatpush1.xpose.msra.mxu0 0.0
        %1170 = vmatprep.subr.mxu0 0.0
        %1171 = vmatpush1.xpose.msra.mxu0 0.0
        %1172 = vmatprep.subr.mxu0 0.0
        %1173 = vmatpush1.xpose.msra.mxu0 0.0
        %1174 = vmatprep.subr.mxu0 0.0
        %1175 = vmatpush1.xpose.msra.mxu0 0.0
        %1176 = vmatprep.subr.mxu0 0.0
        %1177 = vmatpush1.xpose.msra.mxu0 0.0
        %1178 = vmatprep.subr.mxu0 0.0
        %1179 = vmatpush1.xpose.msra.mxu0 0.0
        %1180 = vmatprep.subr.mxu0 0.0
        %1181 = vmatpush1.xpose.msra.mxu0 0.0
        %1182 = vmatprep.subr.mxu0 0.0
        %1183 = vmatpush1.xpose.msra.mxu0 0.0
        %1184 = vmatprep.subr.mxu0 0.0
        %1185 = vmatpush1.xpose.msra.mxu0 0.0
        %1186 = vmatprep.subr.mxu0 0.0
        %1187 = vmatpush1.xpose.msra.mxu0 0.0
        %1188 = vmatprep.subr.mxu0 0.0
        %1189 = vmatpush1.xpose.msra.mxu0 0.0
        %1190 = vmatprep.subr.mxu0 0.0
        %1191 = vmatpush1.xpose.msra.mxu0 0.0
        %1192 = vmatprep.subr.mxu0 0.0
        %1193 = vmatpush1.xpose.msra.mxu0 0.0
        %1194 = vmatprep.subr.mxu0 0.0
        %1195 = vmatpush1.xpose.msra.mxu0 0.0
        %1196 = vmatprep.subr.mxu0 0.0
        %1197 = vmatpush1.xpose.msra.mxu0 0.0
        %1198 = vmatprep.subr.mxu0 0.0
        %1199 = vmatpush1.xpose.msra.mxu0 0.0
        %1200 = vmatprep.subr.mxu0 0.0
        %1201 = vmatpush1.xpose.msra.mxu0 0.0
        %1202 = vmatprep.subr.mxu0 0.0
        %1203 = vmatpush1.xpose.msra.mxu0 0.0
        %1204 = vmatprep.subr.mxu0 0.0
        %1205 = vmatpush1.xpose.msra.mxu0 0.0
        %1206 = vmatprep.subr.mxu0 0.0
        %1207 = vmatpush1.xpose.msra.mxu0 0.0
        %1208 = vmatprep.subr.mxu0 0.0
        %1209 = vmatpush1.xpose.msra.mxu0 0.0
        %1210 = vmatprep.subr.mxu0 0.0
        %1211 = vmatpush1.xpose.msra.mxu0 0.0
        %1212 = vmatprep.subr.mxu0 0.0
        %1213 = vmatpush1.xpose.msra.mxu0 0.0
        %1214 = vmatprep.subr.mxu0 0.0
        %1215 = vmatpush1.xpose.msra.mxu0 0.0
        %1216 = vmatprep.subr.mxu0 0.0
        %1217 = vmatpush1.xpose.msra.mxu0 0.0
        %1218 = vmatprep.subr.mxu0 0.0
        %1219 = vmatpush1.xpose.msra.mxu0 0.0
        %1220 = vmatprep.subr.mxu0 0.0
        %1221 = vmatpush1.xpose.msra.mxu0 0.0
        %1222 = vmatprep.subr.mxu0 0.0
        %1223 = vmatpush1.xpose.msra.mxu0 0.0
        %1224 = vmatprep.mubr.f32.mxu0 0.0
        %1225 = vmatmul.mubr.f32.gmra.mrb[0].mxu0 %v1146
        %v1226 = vpop.f32.mrb[0].mxu0
        %v1227 = vadd.f32 0.0, %v1226
        %v1228 = vpop.f32.mrb[0].mxu0
        %1229 = vmatprep.mubr.f32.mxu0 0.0
        %1230 = vmatmul.mubr.f32.gmra.mrb[0].mxu0 %v1148
        %v1231 = vpop.f32.mrb[0].mxu0
        %v1232 = vadd.f32 0.0, %v1231
        %v1233 = vpop.f32.mrb[0].mxu0
        %1234 = vmatprep.mubr.f32.mxu0 0.0
        %1235 = vmatmul.mubr.f32.gmra.mrb[0].mxu0 %v1150
        %v1236 = vpop.f32.mrb[0].mxu0
        %v1237 = vadd.f32 0.0, %v1236
        %v1238 = vpop.f32.mrb[0].mxu0
        %1239 = vmatprep.mubr.f32.mxu0 0.0
        %1240 = vmatmul.mubr.f32.gmra.mrb[0].mxu0 %v1152
        %v1241 = vpop.f32.mrb[0].mxu0
        %v1242 = vadd.f32 0.0, %v1241
        %v1243 = vpop.f32.mrb[0].mxu0
        %1244 = vdwg.mxu0
        %1245 = vrot.lane.b32.xlu0 %v475, 80
        %v1246 = vpop.permute.xlu0 %1245
        %v1248 = vsel %vm605, %v595, 0
        %v1251 = vsel %vm605, %v596, 0
        %v1253 = vsel %vm612, %v1246, 0
        %1255 = vmatprep.subr.mxu0 0.0
        %1256 = vmatpush1.msra.mxu0 %v1253
        %1257 = vmatprep.subr.mxu0 0.0
        %1258 = vmatpush1.msra.mxu0 0.0
        %1259 = vmatprep.subr.mxu0 0.0
        %1260 = vmatpush1.msra.mxu0 0.0
        %1261 = vmatprep.subr.mxu0 0.0
        %1262 = vmatpush1.msra.mxu0 0.0
        %1263 = vmatprep.subr.mxu0 0.0
        %1264 = vmatpush1.msra.mxu0 0.0
        %1265 = vmatprep.subr.mxu0 0.0
        %1266 = vmatpush1.msra.mxu0 0.0
        %1267 = vmatprep.subr.mxu0 0.0
        %1268 = vmatpush1.msra.mxu0 0.0
        %1269 = vmatprep.subr.mxu0 0.0
        %1270 = vmatpush1.msra.mxu0 0.0
        %1271 = vmatprep.subr.mxu0 0.0
        %1272 = vmatpush1.msra.mxu0 0.0
        %1273 = vmatprep.subr.mxu0 0.0
        %1274 = vmatpush1.msra.mxu0 0.0
        %1275 = vmatprep.subr.mxu0 0.0
        %1276 = vmatpush1.msra.mxu0 0.0
        %1277 = vmatprep.subr.mxu0 0.0
        %1278 = vmatpush1.msra.mxu0 0.0
        %1279 = vmatprep.subr.mxu0 0.0
        %1280 = vmatpush1.msra.mxu0 0.0
        %1281 = vmatprep.subr.mxu0 0.0
        %1282 = vmatpush1.msra.mxu0 0.0
        %1283 = vmatprep.subr.mxu0 0.0
        %1284 = vmatpush1.msra.mxu0 0.0
        %1285 = vmatprep.subr.mxu0 0.0
        %1286 = vmatpush1.msra.mxu0 0.0
        %1287 = vmatprep.subr.mxu0 0.0
        %1288 = vmatpush1.msra.mxu0 0.0
        %1289 = vmatprep.subr.mxu0 0.0
        %1290 = vmatpush1.msra.mxu0 0.0
        %1291 = vmatprep.subr.mxu0 0.0
        %1292 = vmatpush1.msra.mxu0 0.0
        %1293 = vmatprep.subr.mxu0 0.0
        %1294 = vmatpush1.msra.mxu0 0.0
        %1295 = vmatprep.subr.mxu0 0.0
        %1296 = vmatpush1.msra.mxu0 0.0
        %1297 = vmatprep.subr.mxu0 0.0
        %1298 = vmatpush1.msra.mxu0 0.0
        %1299 = vmatprep.subr.mxu0 0.0
        %1300 = vmatpush1.msra.mxu0 0.0
        %1301 = vmatprep.subr.mxu0 0.0
        %1302 = vmatpush1.msra.mxu0 0.0
        %1303 = vmatprep.subr.mxu0 0.0
        %1304 = vmatpush1.msra.mxu0 0.0
        %1305 = vmatprep.subr.mxu0 0.0
        %1306 = vmatpush1.msra.mxu0 0.0
        %1307 = vmatprep.subr.mxu0 0.0
        %1308 = vmatpush1.msra.mxu0 0.0
        %1309 = vmatprep.subr.mxu0 0.0
        %1310 = vmatpush1.msra.mxu0 0.0
        %1311 = vmatprep.subr.mxu0 0.0
        %1312 = vmatpush1.msra.mxu0 0.0
        %1313 = vmatprep.subr.mxu0 0.0
        %1314 = vmatpush1.msra.mxu0 0.0
        %1315 = vmatprep.subr.mxu0 0.0
        %1316 = vmatpush1.msra.mxu0 0.0
        %1317 = vmatprep.subr.mxu0 0.0
        %1318 = vmatpush1.msra.mxu0 0.0
        %1319 = vmatprep.mubr.f32.mxu0 0.0
        %1320 = vmatmul.mubr.f32.gmra.mrb[0].mxu0 %v1248
        %v1321 = vpop.f32.mrb[0].mxu0
        %v1322 = vadd.f32 0.0, %v1321
        %v1323 = vpop.f32.mrb[0].mxu0
        %1324 = vmatprep.mubr.f32.mxu0 0.0
        %1325 = vmatmul.mubr.f32.gmra.mrb[0].mxu0 %v1251
        %v1326 = vpop.f32.mrb[0].mxu0
        %v1327 = vadd.f32 0.0, %v1326
        %v1328 = vpop.f32.mrb[0].mxu0
        %1329 = vdwg.mxu0
        %v1330 = vsel %vm691, %v1322, -inf
        %1331 = vmax.xlane.f32.xlu0 %v1330
        %v1332 = vpop.xlane.xlu0 %1331
        %v1333 = vsel %vm691, %v1327, -inf
        %1334 = vmax.xlane.f32.xlu0 %v1333
        %v1335 = vpop.xlane.xlu0 %1334
        %v1336 = vsub.f32 %v1322, %v1332
        %v1337 = vsub.f32 %v1327, %v1335
        %v1338 = vmul.f32 %v1336, 1.442695
        %v1339 = vpow.pop %v1338
        %v1340 = vmul.f32 %v1337, 1.442695
        %v1341 = vpow.pop %v1340
        %v1342 = vsel %vm691, %v1339, 0.0
        %1343 = vadd.xlane.f32.xlu0 %v1342
        %v1344 = vpop.xlane.xlu0 %1343
        %v1345 = vsel %vm691, %v1341, 0.0
        %1346 = vadd.xlane.f32.xlu0 %v1345
        %v1347 = vpop.xlane.xlu0 %1346
        %v1348 = vrcp.pop %v1344
        %v1349 = vrcp.pop %v1347
        %v1350 = vmul.f32 %v1339, %v1348
        %v1351 = vmul.f32 %v1341, %v1349
        %1352 = vrot.lane.b32.xlu0 %v559, 80
        %v1353 = vpop.permute.xlu0 %1352
        %1354 = vrot.lane.b32.xlu0 %v562, 80
        %v1355 = vpop.permute.xlu0 %1354
        %1356 = vrot.lane.b32.xlu0 %v567, 80
        %v1357 = vpop.permute.xlu0 %1356
        %1358 = vrot.lane.b32.xlu0 %v570, 80
        %v1359 = vpop.permute.xlu0 %1358
        %v1360 = vsel %vm691, %v1353, 0
        %v1362 = vsel %vm691, %v1355, 0
        %v1364 = vsel %vm691, %v1357, 0
        %v1366 = vsel %vm691, %v1359, 0
        %v1369 = vsel %vm691, %v1350, 0
        %v1372 = vsel %vm691, %v1351, 0
        %1374 = vmatprep.subr.mxu0 0.0
        %1375 = vmatpush1.xpose.msra.mxu0 %v1369
        %1376 = vmatprep.subr.mxu0 0.0
        %1377 = vmatpush1.xpose.msra.mxu0 %v1372
        %1378 = vmatprep.subr.mxu0 0.0
        %1379 = vmatpush1.xpose.msra.mxu0 0.0
        %1380 = vmatprep.subr.mxu0 0.0
        %1381 = vmatpush1.xpose.msra.mxu0 0.0
        %1382 = vmatprep.subr.mxu0 0.0
        %1383 = vmatpush1.xpose.msra.mxu0 0.0
        %1384 = vmatprep.subr.mxu0 0.0
        %1385 = vmatpush1.xpose.msra.mxu0 0.0
        %1386 = vmatprep.subr.mxu0 0.0
        %1387 = vmatpush1.xpose.msra.mxu0 0.0
        %1388 = vmatprep.subr.mxu0 0.0
        %1389 = vmatpush1.xpose.msra.mxu0 0.0
        %1390 = vmatprep.subr.mxu0 0.0
        %1391 = vmatpush1.xpose.msra.mxu0 0.0
        %1392 = vmatprep.subr.mxu0 0.0
        %1393 = vmatpush1.xpose.msra.mxu0 0.0
        %1394 = vmatprep.subr.mxu0 0.0
        %1395 = vmatpush1.xpose.msra.mxu0 0.0
        %1396 = vmatprep.subr.mxu0 0.0
        %1397 = vmatpush1.xpose.msra.mxu0 0.0
        %1398 = vmatprep.subr.mxu0 0.0
        %1399 = vmatpush1.xpose.msra.mxu0 0.0
        %1400 = vmatprep.subr.mxu0 0.0
        %1401 = vmatpush1.xpose.msra.mxu0 0.0
        %1402 = vmatprep.subr.mxu0 0.0
        %1403 = vmatpush1.xpose.msra.mxu0 0.0
        %1404 = vmatprep.subr.mxu0 0.0
        %1405 = vmatpush1.xpose.msra.mxu0 0.0
        %1406 = vmatprep.subr.mxu0 0.0
        %1407 = vmatpush1.xpose.msra.mxu0 0.0
        %1408 = vmatprep.subr.mxu0 0.0
        %1409 = vmatpush1.xpose.msra.mxu0 0.0
        %1410 = vmatprep.subr.mxu0 0.0
        %1411 = vmatpush1.xpose.msra.mxu0 0.0
        %1412 = vmatprep.subr.mxu0 0.0
        %1413 = vmatpush1.xpose.msra.mxu0 0.0
        %1414 = vmatprep.subr.mxu0 0.0
        %1415 = vmatpush1.xpose.msra.mxu0 0.0
        %1416 = vmatprep.subr.mxu0 0.0
        %1417 = vmatpush1.xpose.msra.mxu0 0.0
        %1418 = vmatprep.subr.mxu0 0.0
        %1419 = vmatpush1.xpose.msra.mxu0 0.0
        %1420 = vmatprep.subr.mxu0 0.0
        %1421 = vmatpush1.xpose.msra.mxu0 0.0
        %1422 = vmatprep.subr.mxu0 0.0
        %1423 = vmatpush1.xpose.msra.mxu0 0.0
        %1424 = vmatprep.subr.mxu0 0.0
        %1425 = vmatpush1.xpose.msra.mxu0 0.0
        %1426 = vmatprep.subr.mxu0 0.0
        %1427 = vmatpush1.xpose.msra.mxu0 0.0
        %1428 = vmatprep.subr.mxu0 0.0
        %1429 = vmatpush1.xpose.msra.mxu0 0.0
        %1430 = vmatprep.subr.mxu0 0.0
        %1431 = vmatpush1.xpose.msra.mxu0 0.0
        %1432 = vmatprep.subr.mxu0 0.0
        %1433 = vmatpush1.xpose.msra.mxu0 0.0
        %1434 = vmatprep.subr.mxu0 0.0
        %1435 = vmatpush1.xpose.msra.mxu0 0.0
        %1436 = vmatprep.subr.mxu0 0.0
        %1437 = vmatpush1.xpose.msra.mxu0 0.0
        %1438 = vmatprep.mubr.f32.mxu0 0.0
        %1439 = vmatmul.mubr.f32.gmra.mrb[0].mxu0 %v1360
        %v1440 = vpop.f32.mrb[0].mxu0
        %v1441 = vadd.f32 0.0, %v1440
        %v1442 = vpop.f32.mrb[0].mxu0
        %1443 = vmatprep.mubr.f32.mxu0 0.0
        %1444 = vmatmul.mubr.f32.gmra.mrb[0].mxu0 %v1362
        %v1445 = vpop.f32.mrb[0].mxu0
        %v1446 = vadd.f32 0.0, %v1445
        %v1447 = vpop.f32.mrb[0].mxu0
        %1448 = vmatprep.mubr.f32.mxu0 0.0
        %1449 = vmatmul.mubr.f32.gmra.mrb[0].mxu0 %v1364
        %v1450 = vpop.f32.mrb[0].mxu0
        %v1451 = vadd.f32 0.0, %v1450
        %v1452 = vpop.f32.mrb[0].mxu0
        %1453 = vmatprep.mubr.f32.mxu0 0.0
        %1454 = vmatmul.mubr.f32.gmra.mrb[0].mxu0 %v1366
        %v1455 = vpop.f32.mrb[0].mxu0
        %v1456 = vadd.f32 0.0, %v1455
        %v1457 = vpop.f32.mrb[0].mxu0
        %1458 = vdwg.mxu0
        %1459 = vrot.lane.b32.xlu0 %v475, 64
        %v1460 = vpop.permute.xlu0 %1459
        %v1462 = vsel %vm605, %v597, 0
        %v1465 = vsel %vm605, %v598, 0
        %v1467 = vsel %vm612, %v1460, 0
        %1469 = vmatprep.subr.mxu0 0.0
        %1470 = vmatpush1.msra.mxu0 %v1467
        %1471 = vmatprep.subr.mxu0 0.0
        %1472 = vmatpush1.msra.mxu0 0.0
        %1473 = vmatprep.subr.mxu0 0.0
        %1474 = vmatpush1.msra.mxu0 0.0
        %1475 = vmatprep.subr.mxu0 0.0
        %1476 = vmatpush1.msra.mxu0 0.0
        %1477 = vmatprep.subr.mxu0 0.0
        %1478 = vmatpush1.msra.mxu0 0.0
        %1479 = vmatprep.subr.mxu0 0.0
        %1480 = vmatpush1.msra.mxu0 0.0
        %1481 = vmatprep.subr.mxu0 0.0
        %1482 = vmatpush1.msra.mxu0 0.0
        %1483 = vmatprep.subr.mxu0 0.0
        %1484 = vmatpush1.msra.mxu0 0.0
        %1485 = vmatprep.subr.mxu0 0.0
        %1486 = vmatpush1.msra.mxu0 0.0
        %1487 = vmatprep.subr.mxu0 0.0
        %1488 = vmatpush1.msra.mxu0 0.0
        %1489 = vmatprep.subr.mxu0 0.0
        %1490 = vmatpush1.msra.mxu0 0.0
        %1491 = vmatprep.subr.mxu0 0.0
        %1492 = vmatpush1.msra.mxu0 0.0
        %1493 = vmatprep.subr.mxu0 0.0
        %1494 = vmatpush1.msra.mxu0 0.0
        %1495 = vmatprep.subr.mxu0 0.0
        %1496 = vmatpush1.msra.mxu0 0.0
        %1497 = vmatprep.subr.mxu0 0.0
        %1498 = vmatpush1.msra.mxu0 0.0
        %1499 = vmatprep.subr.mxu0 0.0
        %1500 = vmatpush1.msra.mxu0 0.0
        %1501 = vmatprep.subr.mxu0 0.0
        %1502 = vmatpush1.msra.mxu0 0.0
        %1503 = vmatprep.subr.mxu0 0.0
        %1504 = vmatpush1.msra.mxu0 0.0
        %1505 = vmatprep.subr.mxu0 0.0
        %1506 = vmatpush1.msra.mxu0 0.0
        %1507 = vmatprep.subr.mxu0 0.0
        %1508 = vmatpush1.msra.mxu0 0.0
        %1509 = vmatprep.subr.mxu0 0.0
        %1510 = vmatpush1.msra.mxu0 0.0
        %1511 = vmatprep.subr.mxu0 0.0
        %1512 = vmatpush1.msra.mxu0 0.0
        %1513 = vmatprep.subr.mxu0 0.0
        %1514 = vmatpush1.msra.mxu0 0.0
        %1515 = vmatprep.subr.mxu0 0.0
        %1516 = vmatpush1.msra.mxu0 0.0
        %1517 = vmatprep.subr.mxu0 0.0
        %1518 = vmatpush1.msra.mxu0 0.0
        %1519 = vmatprep.subr.mxu0 0.0
        %1520 = vmatpush1.msra.mxu0 0.0
        %1521 = vmatprep.subr.mxu0 0.0
        %1522 = vmatpush1.msra.mxu0 0.0
        %1523 = vmatprep.subr.mxu0 0.0
        %1524 = vmatpush1.msra.mxu0 0.0
        %1525 = vmatprep.subr.mxu0 0.0
        %1526 = vmatpush1.msra.mxu0 0.0
        %1527 = vmatprep.subr.mxu0 0.0
        %1528 = vmatpush1.msra.mxu0 0.0
        %1529 = vmatprep.subr.mxu0 0.0
        %1530 = vmatpush1.msra.mxu0 0.0
        %1531 = vmatprep.subr.mxu0 0.0
        %1532 = vmatpush1.msra.mxu0 0.0
        %1533 = vmatprep.mubr.f32.mxu0 0.0
        %1534 = vmatmul.mubr.f32.gmra.mrb[0].mxu0 %v1462
        %v1535 = vpop.f32.mrb[0].mxu0
        %v1536 = vadd.f32 0.0, %v1535
        %v1537 = vpop.f32.mrb[0].mxu0
        %1538 = vmatprep.mubr.f32.mxu0 0.0
        %1539 = vmatmul.mubr.f32.gmra.mrb[0].mxu0 %v1465
        %v1540 = vpop.f32.mrb[0].mxu0
        %v1541 = vadd.f32 0.0, %v1540
        %v1542 = vpop.f32.mrb[0].mxu0
        %1543 = vdwg.mxu0
        %v1544 = vsel %vm691, %v1536, -inf
        %1545 = vmax.xlane.f32.xlu0 %v1544
        %v1546 = vpop.xlane.xlu0 %1545
        %v1547 = vsel %vm691, %v1541, -inf
        %1548 = vmax.xlane.f32.xlu0 %v1547
        %v1549 = vpop.xlane.xlu0 %1548
        %v1550 = vsub.f32 %v1536, %v1546
        %v1551 = vsub.f32 %v1541, %v1549
        %v1552 = vmul.f32 %v1550, 1.442695
        %v1553 = vpow.pop %v1552
        %v1554 = vmul.f32 %v1551, 1.442695
        %v1555 = vpow.pop %v1554
        %v1556 = vsel %vm691, %v1553, 0.0
        %1557 = vadd.xlane.f32.xlu0 %v1556
        %v1558 = vpop.xlane.xlu0 %1557
        %v1559 = vsel %vm691, %v1555, 0.0
        %1560 = vadd.xlane.f32.xlu0 %v1559
        %v1561 = vpop.xlane.xlu0 %1560
        %v1562 = vrcp.pop %v1558
        %v1563 = vrcp.pop %v1561
        %v1564 = vmul.f32 %v1553, %v1562
        %v1565 = vmul.f32 %v1555, %v1563
        %1566 = vrot.lane.b32.xlu0 %v559, 64
        %v1567 = vpop.permute.xlu0 %1566
        %1568 = vrot.lane.b32.xlu0 %v562, 64
        %v1569 = vpop.permute.xlu0 %1568
        %1570 = vrot.lane.b32.xlu0 %v567, 64
        %v1571 = vpop.permute.xlu0 %1570
        %1572 = vrot.lane.b32.xlu0 %v570, 64
        %v1573 = vpop.permute.xlu0 %1572
        %v1574 = vsel %vm691, %v1567, 0
        %v1576 = vsel %vm691, %v1569, 0
        %v1578 = vsel %vm691, %v1571, 0
        %v1580 = vsel %vm691, %v1573, 0
        %v1583 = vsel %vm691, %v1564, 0
        %v1586 = vsel %vm691, %v1565, 0
        %1588 = vmatprep.subr.mxu0 0.0
        %1589 = vmatpush1.xpose.msra.mxu0 %v1583
        %1590 = vmatprep.subr.mxu0 0.0
        %1591 = vmatpush1.xpose.msra.mxu0 %v1586
        %1592 = vmatprep.subr.mxu0 0.0
        %1593 = vmatpush1.xpose.msra.mxu0 0.0
        %1594 = vmatprep.subr.mxu0 0.0
        %1595 = vmatpush1.xpose.msra.mxu0 0.0
        %1596 = vmatprep.subr.mxu0 0.0
        %1597 = vmatpush1.xpose.msra.mxu0 0.0
        %1598 = vmatprep.subr.mxu0 0.0
        %1599 = vmatpush1.xpose.msra.mxu0 0.0
        %1600 = vmatprep.subr.mxu0 0.0
        %1601 = vmatpush1.xpose.msra.mxu0 0.0
        %1602 = vmatprep.subr.mxu0 0.0
        %1603 = vmatpush1.xpose.msra.mxu0 0.0
        %1604 = vmatprep.subr.mxu0 0.0
        %1605 = vmatpush1.xpose.msra.mxu0 0.0
        %1606 = vmatprep.subr.mxu0 0.0
        %1607 = vmatpush1.xpose.msra.mxu0 0.0
        %1608 = vmatprep.subr.mxu0 0.0
        %1609 = vmatpush1.xpose.msra.mxu0 0.0
        %1610 = vmatprep.subr.mxu0 0.0
        %1611 = vmatpush1.xpose.msra.mxu0 0.0
        %1612 = vmatprep.subr.mxu0 0.0
        %1613 = vmatpush1.xpose.msra.mxu0 0.0
        %1614 = vmatprep.subr.mxu0 0.0
        %1615 = vmatpush1.xpose.msra.mxu0 0.0
        %1616 = vmatprep.subr.mxu0 0.0
        %1617 = vmatpush1.xpose.msra.mxu0 0.0
        %1618 = vmatprep.subr.mxu0 0.0
        %1619 = vmatpush1.xpose.msra.mxu0 0.0
        %1620 = vmatprep.subr.mxu0 0.0
        %1621 = vmatpush1.xpose.msra.mxu0 0.0
        %1622 = vmatprep.subr.mxu0 0.0
        %1623 = vmatpush1.xpose.msra.mxu0 0.0
        %1624 = vmatprep.subr.mxu0 0.0
        %1625 = vmatpush1.xpose.msra.mxu0 0.0
        %1626 = vmatprep.subr.mxu0 0.0
        %1627 = vmatpush1.xpose.msra.mxu0 0.0
        %1628 = vmatprep.subr.mxu0 0.0
        %1629 = vmatpush1.xpose.msra.mxu0 0.0
        %1630 = vmatprep.subr.mxu0 0.0
        %1631 = vmatpush1.xpose.msra.mxu0 0.0
        %1632 = vmatprep.subr.mxu0 0.0
        %1633 = vmatpush1.xpose.msra.mxu0 0.0
        %1634 = vmatprep.subr.mxu0 0.0
        %1635 = vmatpush1.xpose.msra.mxu0 0.0
        %1636 = vmatprep.subr.mxu0 0.0
        %1637 = vmatpush1.xpose.msra.mxu0 0.0
        %1638 = vmatprep.subr.mxu0 0.0
        %1639 = vmatpush1.xpose.msra.mxu0 0.0
        %1640 = vmatprep.subr.mxu0 0.0
        %1641 = vmatpush1.xpose.msra.mxu0 0.0
        %1642 = vmatprep.subr.mxu0 0.0
        %1643 = vmatpush1.xpose.msra.mxu0 0.0
        %1644 = vmatprep.subr.mxu0 0.0
        %1645 = vmatpush1.xpose.msra.mxu0 0.0
        %1646 = vmatprep.subr.mxu0 0.0
        %1647 = vmatpush1.xpose.msra.mxu0 0.0
        %1648 = vmatprep.subr.mxu0 0.0
        %1649 = vmatpush1.xpose.msra.mxu0 0.0
        %1650 = vmatprep.subr.mxu0 0.0
        %1651 = vmatpush1.xpose.msra.mxu0 0.0
        %1652 = vmatprep.mubr.f32.mxu0 0.0
        %1653 = vmatmul.mubr.f32.gmra.mrb[0].mxu0 %v1574
        %v1654 = vpop.f32.mrb[0].mxu0
        %v1655 = vadd.f32 0.0, %v1654
        %v1656 = vpop.f32.mrb[0].mxu0
        %1657 = vmatprep.mubr.f32.mxu0 0.0
        %1658 = vmatmul.mubr.f32.gmra.mrb[0].mxu0 %v1576
        %v1659 = vpop.f32.mrb[0].mxu0
        %v1660 = vadd.f32 0.0, %v1659
        %v1661 = vpop.f32.mrb[0].mxu0
        %1662 = vmatprep.mubr.f32.mxu0 0.0
        %1663 = vmatmul.mubr.f32.gmra.mrb[0].mxu0 %v1578
        %v1664 = vpop.f32.mrb[0].mxu0
        %v1665 = vadd.f32 0.0, %v1664
        %v1666 = vpop.f32.mrb[0].mxu0
        %1667 = vmatprep.mubr.f32.mxu0 0.0
        %1668 = vmatmul.mubr.f32.gmra.mrb[0].mxu0 %v1580
        %v1669 = vpop.f32.mrb[0].mxu0
        %v1670 = vadd.f32 0.0, %v1669
        %v1671 = vpop.f32.mrb[0].mxu0
        %1672 = vdwg.mxu0
        %1673 = vrot.lane.b32.xlu0 %v475, 48
        %v1674 = vpop.permute.xlu0 %1673
        %v1676 = vsel %vm605, %v599, 0
        %v1679 = vsel %vm605, %v600, 0
        %v1681 = vsel %vm612, %v1674, 0
        %1683 = vmatprep.subr.mxu0 0.0
        %1684 = vmatpush1.msra.mxu0 %v1681
        %1685 = vmatprep.subr.mxu0 0.0
        %1686 = vmatpush1.msra.mxu0 0.0
        %1687 = vmatprep.subr.mxu0 0.0
        %1688 = vmatpush1.msra.mxu0 0.0
        %1689 = vmatprep.subr.mxu0 0.0
        %1690 = vmatpush1.msra.mxu0 0.0
        %1691 = vmatprep.subr.mxu0 0.0
        %1692 = vmatpush1.msra.mxu0 0.0
        %1693 = vmatprep.subr.mxu0 0.0
        %1694 = vmatpush1.msra.mxu0 0.0
        %1695 = vmatprep.subr.mxu0 0.0
        %1696 = vmatpush1.msra.mxu0 0.0
        %1697 = vmatprep.subr.mxu0 0.0
        %1698 = vmatpush1.msra.mxu0 0.0
        %1699 = vmatprep.subr.mxu0 0.0
        %1700 = vmatpush1.msra.mxu0 0.0
        %1701 = vmatprep.subr.mxu0 0.0
        %1702 = vmatpush1.msra.mxu0 0.0
        %1703 = vmatprep.subr.mxu0 0.0
        %1704 = vmatpush1.msra.mxu0 0.0
        %1705 = vmatprep.subr.mxu0 0.0
        %1706 = vmatpush1.msra.mxu0 0.0
        %1707 = vmatprep.subr.mxu0 0.0
        %1708 = vmatpush1.msra.mxu0 0.0
        %1709 = vmatprep.subr.mxu0 0.0
        %1710 = vmatpush1.msra.mxu0 0.0
        %1711 = vmatprep.subr.mxu0 0.0
        %1712 = vmatpush1.msra.mxu0 0.0
        %1713 = vmatprep.subr.mxu0 0.0
        %1714 = vmatpush1.msra.mxu0 0.0
        %1715 = vmatprep.subr.mxu0 0.0
        %1716 = vmatpush1.msra.mxu0 0.0
        %1717 = vmatprep.subr.mxu0 0.0
        %1718 = vmatpush1.msra.mxu0 0.0
        %1719 = vmatprep.subr.mxu0 0.0
        %1720 = vmatpush1.msra.mxu0 0.0
        %1721 = vmatprep.subr.mxu0 0.0
        %1722 = vmatpush1.msra.mxu0 0.0
        %1723 = vmatprep.subr.mxu0 0.0
        %1724 = vmatpush1.msra.mxu0 0.0
        %1725 = vmatprep.subr.mxu0 0.0
        %1726 = vmatpush1.msra.mxu0 0.0
        %1727 = vmatprep.subr.mxu0 0.0
        %1728 = vmatpush1.msra.mxu0 0.0
        %1729 = vmatprep.subr.mxu0 0.0
        %1730 = vmatpush1.msra.mxu0 0.0
        %1731 = vmatprep.subr.mxu0 0.0
        %1732 = vmatpush1.msra.mxu0 0.0
        %1733 = vmatprep.subr.mxu0 0.0
        %1734 = vmatpush1.msra.mxu0 0.0
        %1735 = vmatprep.subr.mxu0 0.0
        %1736 = vmatpush1.msra.mxu0 0.0
        %1737 = vmatprep.subr.mxu0 0.0
        %1738 = vmatpush1.msra.mxu0 0.0
        %1739 = vmatprep.subr.mxu0 0.0
        %1740 = vmatpush1.msra.mxu0 0.0
        %1741 = vmatprep.subr.mxu0 0.0
        %1742 = vmatpush1.msra.mxu0 0.0
        %1743 = vmatprep.subr.mxu0 0.0
        %1744 = vmatpush1.msra.mxu0 0.0
        %1745 = vmatprep.subr.mxu0 0.0
        %1746 = vmatpush1.msra.mxu0 0.0
        %1747 = vmatprep.mubr.f32.mxu0 0.0
        %1748 = vmatmul.mubr.f32.gmra.mrb[0].mxu0 %v1676
        %v1749 = vpop.f32.mrb[0].mxu0
        %v1750 = vadd.f32 0.0, %v1749
        %v1751 = vpop.f32.mrb[0].mxu0
        %1752 = vmatprep.mubr.f32.mxu0 0.0
        %1753 = vmatmul.mubr.f32.gmra.mrb[0].mxu0 %v1679
        %v1754 = vpop.f32.mrb[0].mxu0
        %v1755 = vadd.f32 0.0, %v1754
        %v1756 = vpop.f32.mrb[0].mxu0
        %1757 = vdwg.mxu0
        %v1758 = vsel %vm691, %v1750, -inf
        %1759 = vmax.xlane.f32.xlu0 %v1758
        %v1760 = vpop.xlane.xlu0 %1759
        %v1761 = vsel %vm691, %v1755, -inf
        %1762 = vmax.xlane.f32.xlu0 %v1761
        %v1763 = vpop.xlane.xlu0 %1762
        %v1764 = vsub.f32 %v1750, %v1760
        %v1765 = vsub.f32 %v1755, %v1763
        %v1766 = vmul.f32 %v1764, 1.442695
        %v1767 = vpow.pop %v1766
        %v1768 = vmul.f32 %v1765, 1.442695
        %v1769 = vpow.pop %v1768
        %v1770 = vsel %vm691, %v1767, 0.0
        %1771 = vadd.xlane.f32.xlu0 %v1770
        %v1772 = vpop.xlane.xlu0 %1771
        %v1773 = vsel %vm691, %v1769, 0.0
        %1774 = vadd.xlane.f32.xlu0 %v1773
        %v1775 = vpop.xlane.xlu0 %1774
        %v1776 = vrcp.pop %v1772
        %v1777 = vrcp.pop %v1775
        %v1778 = vmul.f32 %v1767, %v1776
        %v1779 = vmul.f32 %v1769, %v1777
        %1780 = vrot.lane.b32.xlu0 %v559, 48
        %v1781 = vpop.permute.xlu0 %1780
        %1782 = vrot.lane.b32.xlu0 %v562, 48
        %v1783 = vpop.permute.xlu0 %1782
        %1784 = vrot.lane.b32.xlu0 %v567, 48
        %v1785 = vpop.permute.xlu0 %1784
        %1786 = vrot.lane.b32.xlu0 %v570, 48
        %v1787 = vpop.permute.xlu0 %1786
        %v1788 = vsel %vm691, %v1781, 0
        %v1790 = vsel %vm691, %v1783, 0
        %v1792 = vsel %vm691, %v1785, 0
        %v1794 = vsel %vm691, %v1787, 0
        %v1797 = vsel %vm691, %v1778, 0
        %v1800 = vsel %vm691, %v1779, 0
        %1802 = vmatprep.subr.mxu0 0.0
        %1803 = vmatpush1.xpose.msra.mxu0 %v1797
        %1804 = vmatprep.subr.mxu0 0.0
        %1805 = vmatpush1.xpose.msra.mxu0 %v1800
        %1806 = vmatprep.subr.mxu0 0.0
        %1807 = vmatpush1.xpose.msra.mxu0 0.0
        %1808 = vmatprep.subr.mxu0 0.0
        %1809 = vmatpush1.xpose.msra.mxu0 0.0
        %1810 = vmatprep.subr.mxu0 0.0
        %1811 = vmatpush1.xpose.msra.mxu0 0.0
        %1812 = vmatprep.subr.mxu0 0.0
        %1813 = vmatpush1.xpose.msra.mxu0 0.0
        %1814 = vmatprep.subr.mxu0 0.0
        %1815 = vmatpush1.xpose.msra.mxu0 0.0
        %1816 = vmatprep.subr.mxu0 0.0
        %1817 = vmatpush1.xpose.msra.mxu0 0.0
        %1818 = vmatprep.subr.mxu0 0.0
        %1819 = vmatpush1.xpose.msra.mxu0 0.0
        %1820 = vmatprep.subr.mxu0 0.0
        %1821 = vmatpush1.xpose.msra.mxu0 0.0
        %1822 = vmatprep.subr.mxu0 0.0
        %1823 = vmatpush1.xpose.msra.mxu0 0.0
        %1824 = vmatprep.subr.mxu0 0.0
        %1825 = vmatpush1.xpose.msra.mxu0 0.0
        %1826 = vmatprep.subr.mxu0 0.0
        %1827 = vmatpush1.xpose.msra.mxu0 0.0
        %1828 = vmatprep.subr.mxu0 0.0
        %1829 = vmatpush1.xpose.msra.mxu0 0.0
        %1830 = vmatprep.subr.mxu0 0.0
        %1831 = vmatpush1.xpose.msra.mxu0 0.0
        %1832 = vmatprep.subr.mxu0 0.0
        %1833 = vmatpush1.xpose.msra.mxu0 0.0
        %1834 = vmatprep.subr.mxu0 0.0
        %1835 = vmatpush1.xpose.msra.mxu0 0.0
        %1836 = vmatprep.subr.mxu0 0.0
        %1837 = vmatpush1.xpose.msra.mxu0 0.0
        %1838 = vmatprep.subr.mxu0 0.0
        %1839 = vmatpush1.xpose.msra.mxu0 0.0
        %1840 = vmatprep.subr.mxu0 0.0
        %1841 = vmatpush1.xpose.msra.mxu0 0.0
        %1842 = vmatprep.subr.mxu0 0.0
        %1843 = vmatpush1.xpose.msra.mxu0 0.0
        %1844 = vmatprep.subr.mxu0 0.0
        %1845 = vmatpush1.xpose.msra.mxu0 0.0
        %1846 = vmatprep.subr.mxu0 0.0
        %1847 = vmatpush1.xpose.msra.mxu0 0.0
        %1848 = vmatprep.subr.mxu0 0.0
        %1849 = vmatpush1.xpose.msra.mxu0 0.0
        %1850 = vmatprep.subr.mxu0 0.0
        %1851 = vmatpush1.xpose.msra.mxu0 0.0
        %1852 = vmatprep.subr.mxu0 0.0
        %1853 = vmatpush1.xpose.msra.mxu0 0.0
        %1854 = vmatprep.subr.mxu0 0.0
        %1855 = vmatpush1.xpose.msra.mxu0 0.0
        %1856 = vmatprep.subr.mxu0 0.0
        %1857 = vmatpush1.xpose.msra.mxu0 0.0
        %1858 = vmatprep.subr.mxu0 0.0
        %1859 = vmatpush1.xpose.msra.mxu0 0.0
        %1860 = vmatprep.subr.mxu0 0.0
        %1861 = vmatpush1.xpose.msra.mxu0 0.0
        %1862 = vmatprep.subr.mxu0 0.0
        %1863 = vmatpush1.xpose.msra.mxu0 0.0
        %1864 = vmatprep.subr.mxu0 0.0
        %1865 = vmatpush1.xpose.msra.mxu0 0.0
        %1866 = vmatprep.mubr.f32.mxu0 0.0
        %1867 = vmatmul.mubr.f32.gmra.mrb[0].mxu0 %v1788
        %v1868 = vpop.f32.mrb[0].mxu0
        %v1869 = vadd.f32 0.0, %v1868
        %v1870 = vpop.f32.mrb[0].mxu0
        %1871 = vmatprep.mubr.f32.mxu0 0.0
        %1872 = vmatmul.mubr.f32.gmra.mrb[0].mxu0 %v1790
        %v1873 = vpop.f32.mrb[0].mxu0
        %v1874 = vadd.f32 0.0, %v1873
        %v1875 = vpop.f32.mrb[0].mxu0
        %1876 = vmatprep.mubr.f32.mxu0 0.0
        %1877 = vmatmul.mubr.f32.gmra.mrb[0].mxu0 %v1792
        %v1878 = vpop.f32.mrb[0].mxu0
        %v1879 = vadd.f32 0.0, %v1878
        %v1880 = vpop.f32.mrb[0].mxu0
        %1881 = vmatprep.mubr.f32.mxu0 0.0
        %1882 = vmatmul.mubr.f32.gmra.mrb[0].mxu0 %v1794
        %v1883 = vpop.f32.mrb[0].mxu0
        %v1884 = vadd.f32 0.0, %v1883
        %v1885 = vpop.f32.mrb[0].mxu0
        %1886 = vdwg.mxu0
        %1887 = vrot.lane.b32.xlu0 %v475, 32
        %v1888 = vpop.permute.xlu0 %1887
        %v1890 = vsel %vm605, %v601, 0
        %v1893 = vsel %vm605, %v602, 0
        %v1895 = vsel %vm612, %v1888, 0
        %1897 = vmatprep.subr.mxu0 0.0
        %1898 = vmatpush1.msra.mxu0 %v1895
        %1899 = vmatprep.subr.mxu0 0.0
        %1900 = vmatpush1.msra.mxu0 0.0
        %1901 = vmatprep.subr.mxu0 0.0
        %1902 = vmatpush1.msra.mxu0 0.0
        %1903 = vmatprep.subr.mxu0 0.0
        %1904 = vmatpush1.msra.mxu0 0.0
        %1905 = vmatprep.subr.mxu0 0.0
        %1906 = vmatpush1.msra.mxu0 0.0
        %1907 = vmatprep.subr.mxu0 0.0
        %1908 = vmatpush1.msra.mxu0 0.0
        %1909 = vmatprep.subr.mxu0 0.0
        %1910 = vmatpush1.msra.mxu0 0.0
        %1911 = vmatprep.subr.mxu0 0.0
        %1912 = vmatpush1.msra.mxu0 0.0
        %1913 = vmatprep.subr.mxu0 0.0
        %1914 = vmatpush1.msra.mxu0 0.0
        %1915 = vmatprep.subr.mxu0 0.0
        %1916 = vmatpush1.msra.mxu0 0.0
        %1917 = vmatprep.subr.mxu0 0.0
        %1918 = vmatpush1.msra.mxu0 0.0
        %1919 = vmatprep.subr.mxu0 0.0
        %1920 = vmatpush1.msra.mxu0 0.0
        %1921 = vmatprep.subr.mxu0 0.0
        %1922 = vmatpush1.msra.mxu0 0.0
        %1923 = vmatprep.subr.mxu0 0.0
        %1924 = vmatpush1.msra.mxu0 0.0
        %1925 = vmatprep.subr.mxu0 0.0
        %1926 = vmatpush1.msra.mxu0 0.0
        %1927 = vmatprep.subr.mxu0 0.0
        %1928 = vmatpush1.msra.mxu0 0.0
        %1929 = vmatprep.subr.mxu0 0.0
        %1930 = vmatpush1.msra.mxu0 0.0
        %1931 = vmatprep.subr.mxu0 0.0
        %1932 = vmatpush1.msra.mxu0 0.0
        %1933 = vmatprep.subr.mxu0 0.0
        %1934 = vmatpush1.msra.mxu0 0.0
        %1935 = vmatprep.subr.mxu0 0.0
        %1936 = vmatpush1.msra.mxu0 0.0
        %1937 = vmatprep.subr.mxu0 0.0
        %1938 = vmatpush1.msra.mxu0 0.0
        %1939 = vmatprep.subr.mxu0 0.0
        %1940 = vmatpush1.msra.mxu0 0.0
        %1941 = vmatprep.subr.mxu0 0.0
        %1942 = vmatpush1.msra.mxu0 0.0
        %1943 = vmatprep.subr.mxu0 0.0
        %1944 = vmatpush1.msra.mxu0 0.0
        %1945 = vmatprep.subr.mxu0 0.0
        %1946 = vmatpush1.msra.mxu0 0.0
        %1947 = vmatprep.subr.mxu0 0.0
        %1948 = vmatpush1.msra.mxu0 0.0
        %1949 = vmatprep.subr.mxu0 0.0
        %1950 = vmatpush1.msra.mxu0 0.0
        %1951 = vmatprep.subr.mxu0 0.0
        %1952 = vmatpush1.msra.mxu0 0.0
        %1953 = vmatprep.subr.mxu0 0.0
        %1954 = vmatpush1.msra.mxu0 0.0
        %1955 = vmatprep.subr.mxu0 0.0
        %1956 = vmatpush1.msra.mxu0 0.0
        %1957 = vmatprep.subr.mxu0 0.0
        %1958 = vmatpush1.msra.mxu0 0.0
        %1959 = vmatprep.subr.mxu0 0.0
        %1960 = vmatpush1.msra.mxu0 0.0
        %1961 = vmatprep.mubr.f32.mxu0 0.0
        %1962 = vmatmul.mubr.f32.gmra.mrb[0].mxu0 %v1890
        %v1963 = vpop.f32.mrb[0].mxu0
        %v1964 = vadd.f32 0.0, %v1963
        %v1965 = vpop.f32.mrb[0].mxu0
        %1966 = vmatprep.mubr.f32.mxu0 0.0
        %1967 = vmatmul.mubr.f32.gmra.mrb[0].mxu0 %v1893
        %v1968 = vpop.f32.mrb[0].mxu0
        %v1969 = vadd.f32 0.0, %v1968
        %v1970 = vpop.f32.mrb[0].mxu0
        %1971 = vdwg.mxu0
        %v1972 = vsel %vm691, %v1964, -inf
        %1973 = vmax.xlane.f32.xlu0 %v1972
        %v1974 = vpop.xlane.xlu0 %1973
        %v1975 = vsel %vm691, %v1969, -inf
        %1976 = vmax.xlane.f32.xlu0 %v1975
        %v1977 = vpop.xlane.xlu0 %1976
        %v1978 = vsub.f32 %v1964, %v1974
        %v1979 = vsub.f32 %v1969, %v1977
        %v1980 = vmul.f32 %v1978, 1.442695
        %v1981 = vpow.pop %v1980
        %v1982 = vmul.f32 %v1979, 1.442695
        %v1983 = vpow.pop %v1982
        %v1984 = vsel %vm691, %v1981, 0.0
        %1985 = vadd.xlane.f32.xlu0 %v1984
        %v1986 = vpop.xlane.xlu0 %1985
        %v1987 = vsel %vm691, %v1983, 0.0
        %1988 = vadd.xlane.f32.xlu0 %v1987
        %v1989 = vpop.xlane.xlu0 %1988
        %v1990 = vrcp.pop %v1986
        %v1991 = vrcp.pop %v1989
        %v1992 = vmul.f32 %v1981, %v1990
        %v1993 = vmul.f32 %v1983, %v1991
        %1994 = vrot.lane.b32.xlu0 %v559, 32
        %v1995 = vpop.permute.xlu0 %1994
        %1996 = vrot.lane.b32.xlu0 %v562, 32
        %v1997 = vpop.permute.xlu0 %1996
        %1998 = vrot.lane.b32.xlu0 %v567, 32
        %v1999 = vpop.permute.xlu0 %1998
        %2000 = vrot.lane.b32.xlu0 %v570, 32
        %v2001 = vpop.permute.xlu0 %2000
        %v2002 = vsel %vm691, %v1995, 0
        %v2004 = vsel %vm691, %v1997, 0
        %v2006 = vsel %vm691, %v1999, 0
        %v2008 = vsel %vm691, %v2001, 0
        %v2011 = vsel %vm691, %v1992, 0
        %v2014 = vsel %vm691, %v1993, 0
        %2016 = vmatprep.subr.mxu0 0.0
        %2017 = vmatpush1.xpose.msra.mxu0 %v2011
        %2018 = vmatprep.subr.mxu0 0.0
        %2019 = vmatpush1.xpose.msra.mxu0 %v2014
        %2020 = vmatprep.subr.mxu0 0.0
        %2021 = vmatpush1.xpose.msra.mxu0 0.0
        %2022 = vmatprep.subr.mxu0 0.0
        %2023 = vmatpush1.xpose.msra.mxu0 0.0
        %2024 = vmatprep.subr.mxu0 0.0
        %2025 = vmatpush1.xpose.msra.mxu0 0.0
        %2026 = vmatprep.subr.mxu0 0.0
        %2027 = vmatpush1.xpose.msra.mxu0 0.0
        %2028 = vmatprep.subr.mxu0 0.0
        %2029 = vmatpush1.xpose.msra.mxu0 0.0
        %2030 = vmatprep.subr.mxu0 0.0
        %2031 = vmatpush1.xpose.msra.mxu0 0.0
        %2032 = vmatprep.subr.mxu0 0.0
        %2033 = vmatpush1.xpose.msra.mxu0 0.0
        %2034 = vmatprep.subr.mxu0 0.0
        %2035 = vmatpush1.xpose.msra.mxu0 0.0
        %2036 = vmatprep.subr.mxu0 0.0
        %2037 = vmatpush1.xpose.msra.mxu0 0.0
        %2038 = vmatprep.subr.mxu0 0.0
        %2039 = vmatpush1.xpose.msra.mxu0 0.0
        %2040 = vmatprep.subr.mxu0 0.0
        %2041 = vmatpush1.xpose.msra.mxu0 0.0
        %2042 = vmatprep.subr.mxu0 0.0
        %2043 = vmatpush1.xpose.msra.mxu0 0.0
        %2044 = vmatprep.subr.mxu0 0.0
        %2045 = vmatpush1.xpose.msra.mxu0 0.0
        %2046 = vmatprep.subr.mxu0 0.0
        %2047 = vmatpush1.xpose.msra.mxu0 0.0
        %2048 = vmatprep.subr.mxu0 0.0
        %2049 = vmatpush1.xpose.msra.mxu0 0.0
        %2050 = vmatprep.subr.mxu0 0.0
        %2051 = vmatpush1.xpose.msra.mxu0 0.0
        %2052 = vmatprep.subr.mxu0 0.0
        %2053 = vmatpush1.xpose.msra.mxu0 0.0
        %2054 = vmatprep.subr.mxu0 0.0
        %2055 = vmatpush1.xpose.msra.mxu0 0.0
        %2056 = vmatprep.subr.mxu0 0.0
        %2057 = vmatpush1.xpose.msra.mxu0 0.0
        %2058 = vmatprep.subr.mxu0 0.0
        %2059 = vmatpush1.xpose.msra.mxu0 0.0
        %2060 = vmatprep.subr.mxu0 0.0
        %2061 = vmatpush1.xpose.msra.mxu0 0.0
        %2062 = vmatprep.subr.mxu0 0.0
        %2063 = vmatpush1.xpose.msra.mxu0 0.0
        %2064 = vmatprep.subr.mxu0 0.0
        %2065 = vmatpush1.xpose.msra.mxu0 0.0
        %2066 = vmatprep.subr.mxu0 0.0
        %2067 = vmatpush1.xpose.msra.mxu0 0.0
        %2068 = vmatprep.subr.mxu0 0.0
        %2069 = vmatpush1.xpose.msra.mxu0 0.0
        %2070 = vmatprep.subr.mxu0 0.0
        %2071 = vmatpush1.xpose.msra.mxu0 0.0
        %2072 = vmatprep.subr.mxu0 0.0
        %2073 = vmatpush1.xpose.msra.mxu0 0.0
        %2074 = vmatprep.subr.mxu0 0.0
        %2075 = vmatpush1.xpose.msra.mxu0 0.0
        %2076 = vmatprep.subr.mxu0 0.0
        %2077 = vmatpush1.xpose.msra.mxu0 0.0
        %2078 = vmatprep.subr.mxu0 0.0
        %2079 = vmatpush1.xpose.msra.mxu0 0.0
        %2080 = vmatprep.mubr.f32.mxu0 0.0
        %2081 = vmatmul.mubr.f32.gmra.mrb[0].mxu0 %v2002
        %v2082 = vpop.f32.mrb[0].mxu0
        %v2083 = vadd.f32 0.0, %v2082
        %v2084 = vpop.f32.mrb[0].mxu0
        %2085 = vmatprep.mubr.f32.mxu0 0.0
        %2086 = vmatmul.mubr.f32.gmra.mrb[0].mxu0 %v2004
        %v2087 = vpop.f32.mrb[0].mxu0
        %v2088 = vadd.f32 0.0, %v2087
        %v2089 = vpop.f32.mrb[0].mxu0
        %2090 = vmatprep.mubr.f32.mxu0 0.0
        %2091 = vmatmul.mubr.f32.gmra.mrb[0].mxu0 %v2006
        %v2092 = vpop.f32.mrb[0].mxu0
        %v2093 = vadd.f32 0.0, %v2092
        %v2094 = vpop.f32.mrb[0].mxu0
        %2095 = vmatprep.mubr.f32.mxu0 0.0
        %2096 = vmatmul.mubr.f32.gmra.mrb[0].mxu0 %v2008
        %v2097 = vpop.f32.mrb[0].mxu0
        %v2098 = vadd.f32 0.0, %v2097
        %v2099 = vpop.f32.mrb[0].mxu0
        %2100 = vdwg.mxu0
        %2101 = vrot.lane.b32.xlu0 %v475, 16
        %v2102 = vpop.permute.xlu0 %2101
        %v2104 = vsel %vm605, %v603, 0
        %v2107 = vsel %vm605, %v604, 0
        %v2109 = vsel %vm612, %v2102, 0
        %2111 = vmatprep.subr.mxu0 0.0
        %2112 = vmatpush1.msra.mxu0 %v2109
        %2113 = vmatprep.subr.mxu0 0.0
        %2114 = vmatpush1.msra.mxu0 0.0
        %2115 = vmatprep.subr.mxu0 0.0
        %2116 = vmatpush1.msra.mxu0 0.0
        %2117 = vmatprep.subr.mxu0 0.0
        %2118 = vmatpush1.msra.mxu0 0.0
        %2119 = vmatprep.subr.mxu0 0.0
        %2120 = vmatpush1.msra.mxu0 0.0
        %2121 = vmatprep.subr.mxu0 0.0
        %2122 = vmatpush1.msra.mxu0 0.0
        %2123 = vmatprep.subr.mxu0 0.0
        %2124 = vmatpush1.msra.mxu0 0.0
        %2125 = vmatprep.subr.mxu0 0.0
        %2126 = vmatpush1.msra.mxu0 0.0
        %2127 = vmatprep.subr.mxu0 0.0
        %2128 = vmatpush1.msra.mxu0 0.0
        %2129 = vmatprep.subr.mxu0 0.0
        %2130 = vmatpush1.msra.mxu0 0.0
        %2131 = vmatprep.subr.mxu0 0.0
        %2132 = vmatpush1.msra.mxu0 0.0
        %2133 = vmatprep.subr.mxu0 0.0
        %2134 = vmatpush1.msra.mxu0 0.0
        %2135 = vmatprep.subr.mxu0 0.0
        %2136 = vmatpush1.msra.mxu0 0.0
        %2137 = vmatprep.subr.mxu0 0.0
        %2138 = vmatpush1.msra.mxu0 0.0
        %2139 = vmatprep.subr.mxu0 0.0
        %2140 = vmatpush1.msra.mxu0 0.0
        %2141 = vmatprep.subr.mxu0 0.0
        %2142 = vmatpush1.msra.mxu0 0.0
        %2143 = vmatprep.subr.mxu0 0.0
        %2144 = vmatpush1.msra.mxu0 0.0
        %2145 = vmatprep.subr.mxu0 0.0
        %2146 = vmatpush1.msra.mxu0 0.0
        %2147 = vmatprep.subr.mxu0 0.0
        %2148 = vmatpush1.msra.mxu0 0.0
        %2149 = vmatprep.subr.mxu0 0.0
        %2150 = vmatpush1.msra.mxu0 0.0
        %2151 = vmatprep.subr.mxu0 0.0
        %2152 = vmatpush1.msra.mxu0 0.0
        %2153 = vmatprep.subr.mxu0 0.0
        %2154 = vmatpush1.msra.mxu0 0.0
        %2155 = vmatprep.subr.mxu0 0.0
        %2156 = vmatpush1.msra.mxu0 0.0
        %2157 = vmatprep.subr.mxu0 0.0
        %2158 = vmatpush1.msra.mxu0 0.0
        %2159 = vmatprep.subr.mxu0 0.0
        %2160 = vmatpush1.msra.mxu0 0.0
        %2161 = vmatprep.subr.mxu0 0.0
        %2162 = vmatpush1.msra.mxu0 0.0
        %2163 = vmatprep.subr.mxu0 0.0
        %2164 = vmatpush1.msra.mxu0 0.0
        %2165 = vmatprep.subr.mxu0 0.0
        %2166 = vmatpush1.msra.mxu0 0.0
        %2167 = vmatprep.subr.mxu0 0.0
        %2168 = vmatpush1.msra.mxu0 0.0
        %2169 = vmatprep.subr.mxu0 0.0
        %2170 = vmatpush1.msra.mxu0 0.0
        %2171 = vmatprep.subr.mxu0 0.0
        %2172 = vmatpush1.msra.mxu0 0.0
        %2173 = vmatprep.subr.mxu0 0.0
        %2174 = vmatpush1.msra.mxu0 0.0
        %2175 = vmatprep.mubr.f32.mxu0 0.0
        %2176 = vmatmul.mubr.f32.gmra.mrb[0].mxu0 %v2104
        %v2177 = vpop.f32.mrb[0].mxu0
        %v2178 = vadd.f32 0.0, %v2177
        %v2179 = vpop.f32.mrb[0].mxu0
        %2180 = vmatprep.mubr.f32.mxu0 0.0
        %2181 = vmatmul.mubr.f32.gmra.mrb[0].mxu0 %v2107
        %v2182 = vpop.f32.mrb[0].mxu0
        %v2183 = vadd.f32 0.0, %v2182
        %v2184 = vpop.f32.mrb[0].mxu0
        %2185 = vdwg.mxu0
        %v2186 = vsel %vm691, %v2178, -inf
        %2187 = vmax.xlane.f32.xlu0 %v2186
        %v2188 = vpop.xlane.xlu0 %2187
        %v2189 = vsel %vm691, %v2183, -inf
        %2190 = vmax.xlane.f32.xlu0 %v2189
        %v2191 = vpop.xlane.xlu0 %2190
        %v2192 = vsub.f32 %v2178, %v2188
        %v2193 = vsub.f32 %v2183, %v2191
        %v2194 = vmul.f32 %v2192, 1.442695
        %v2195 = vpow.pop %v2194
        %v2196 = vmul.f32 %v2193, 1.442695
        %v2197 = vpow.pop %v2196
        %v2198 = vsel %vm691, %v2195, 0.0
        %2199 = vadd.xlane.f32.xlu0 %v2198
        %v2200 = vpop.xlane.xlu0 %2199
        %v2201 = vsel %vm691, %v2197, 0.0
        %2202 = vadd.xlane.f32.xlu0 %v2201
        %v2203 = vpop.xlane.xlu0 %2202
        %v2204 = vrcp.pop %v2200
        %v2205 = vrcp.pop %v2203
        %v2206 = vmul.f32 %v2195, %v2204
        %v2207 = vmul.f32 %v2197, %v2205
        %2208 = vrot.lane.b32.xlu0 %v559, 16
        %v2209 = vpop.permute.xlu0 %2208
        %2210 = vrot.lane.b32.xlu0 %v562, 16
        %v2211 = vpop.permute.xlu0 %2210
        %2212 = vrot.lane.b32.xlu0 %v567, 16
        %v2213 = vpop.permute.xlu0 %2212
        %2214 = vrot.lane.b32.xlu0 %v570, 16
        %v2215 = vpop.permute.xlu0 %2214
        %v2216 = vsel %vm691, %v2209, 0
        %v2218 = vsel %vm691, %v2211, 0
        %v2220 = vsel %vm691, %v2213, 0
        %v2222 = vsel %vm691, %v2215, 0
        %v2225 = vsel %vm691, %v2206, 0
        %v2228 = vsel %vm691, %v2207, 0
        %2230 = vmatprep.subr.mxu0 0.0
        %2231 = vmatpush1.xpose.msra.mxu0 %v2225
        %2232 = vmatprep.subr.mxu0 0.0
        %2233 = vmatpush1.xpose.msra.mxu0 %v2228
        %2234 = vmatprep.subr.mxu0 0.0
        %2235 = vmatpush1.xpose.msra.mxu0 0.0
        %2236 = vmatprep.subr.mxu0 0.0
        %2237 = vmatpush1.xpose.msra.mxu0 0.0
        %2238 = vmatprep.subr.mxu0 0.0
        %2239 = vmatpush1.xpose.msra.mxu0 0.0
        %2240 = vmatprep.subr.mxu0 0.0
        %2241 = vmatpush1.xpose.msra.mxu0 0.0
        %2242 = vmatprep.subr.mxu0 0.0
        %2243 = vmatpush1.xpose.msra.mxu0 0.0
        %2244 = vmatprep.subr.mxu0 0.0
        %2245 = vmatpush1.xpose.msra.mxu0 0.0
        %2246 = vmatprep.subr.mxu0 0.0
        %2247 = vmatpush1.xpose.msra.mxu0 0.0
        %2248 = vmatprep.subr.mxu0 0.0
        %2249 = vmatpush1.xpose.msra.mxu0 0.0
        %2250 = vmatprep.subr.mxu0 0.0
        %2251 = vmatpush1.xpose.msra.mxu0 0.0
        %2252 = vmatprep.subr.mxu0 0.0
        %2253 = vmatpush1.xpose.msra.mxu0 0.0
        %2254 = vmatprep.subr.mxu0 0.0
        %2255 = vmatpush1.xpose.msra.mxu0 0.0
        %2256 = vmatprep.subr.mxu0 0.0
        %2257 = vmatpush1.xpose.msra.mxu0 0.0
        %2258 = vmatprep.subr.mxu0 0.0
        %2259 = vmatpush1.xpose.msra.mxu0 0.0
        %2260 = vmatprep.subr.mxu0 0.0
        %2261 = vmatpush1.xpose.msra.mxu0 0.0
        %2262 = vmatprep.subr.mxu0 0.0
        %2263 = vmatpush1.xpose.msra.mxu0 0.0
        %2264 = vmatprep.subr.mxu0 0.0
        %2265 = vmatpush1.xpose.msra.mxu0 0.0
        %2266 = vmatprep.subr.mxu0 0.0
        %2267 = vmatpush1.xpose.msra.mxu0 0.0
        %2268 = vmatprep.subr.mxu0 0.0
        %2269 = vmatpush1.xpose.msra.mxu0 0.0
        %2270 = vmatprep.subr.mxu0 0.0
        %2271 = vmatpush1.xpose.msra.mxu0 0.0
        %2272 = vmatprep.subr.mxu0 0.0
        %2273 = vmatpush1.xpose.msra.mxu0 0.0
        %2274 = vmatprep.subr.mxu0 0.0
        %2275 = vmatpush1.xpose.msra.mxu0 0.0
        %2276 = vmatprep.subr.mxu0 0.0
        %2277 = vmatpush1.xpose.msra.mxu0 0.0
        %2278 = vmatprep.subr.mxu0 0.0
        %2279 = vmatpush1.xpose.msra.mxu0 0.0
        %2280 = vmatprep.subr.mxu0 0.0
        %2281 = vmatpush1.xpose.msra.mxu0 0.0
        %2282 = vmatprep.subr.mxu0 0.0
        %2283 = vmatpush1.xpose.msra.mxu0 0.0
        %2284 = vmatprep.subr.mxu0 0.0
        %2285 = vmatpush1.xpose.msra.mxu0 0.0
        %2286 = vmatprep.subr.mxu0 0.0
        %2287 = vmatpush1.xpose.msra.mxu0 0.0
        %2288 = vmatprep.subr.mxu0 0.0
        %2289 = vmatpush1.xpose.msra.mxu0 0.0
        %2290 = vmatprep.subr.mxu0 0.0
        %2291 = vmatpush1.xpose.msra.mxu0 0.0
        %2292 = vmatprep.subr.mxu0 0.0
        %2293 = vmatpush1.xpose.msra.mxu0 0.0
        %2294 = vmatprep.mubr.f32.mxu0 0.0
        %2295 = vmatmul.mubr.f32.gmra.mrb[0].mxu0 %v2216
        %v2296 = vpop.f32.mrb[0].mxu0
        %v2297 = vadd.f32 0.0, %v2296
        %v2298 = vpop.f32.mrb[0].mxu0
        %2299 = vmatprep.mubr.f32.mxu0 0.0
        %2300 = vmatmul.mubr.f32.gmra.mrb[0].mxu0 %v2218
        %v2301 = vpop.f32.mrb[0].mxu0
        %v2302 = vadd.f32 0.0, %v2301
        %v2303 = vpop.f32.mrb[0].mxu0
        %2304 = vmatprep.mubr.f32.mxu0 0.0
        %2305 = vmatmul.mubr.f32.gmra.mrb[0].mxu0 %v2220
        %v2306 = vpop.f32.mrb[0].mxu0
        %v2307 = vadd.f32 0.0, %v2306
        %v2308 = vpop.f32.mrb[0].mxu0
        %2309 = vmatprep.mubr.f32.mxu0 0.0
        %2310 = vmatmul.mubr.f32.gmra.mrb[0].mxu0 %v2222
        %v2311 = vpop.f32.mrb[0].mxu0
        %v2312 = vadd.f32 0.0, %v2311
        %v2313 = vpop.f32.mrb[0].mxu0
        %2314 = vdwg.mxu0
        %2319 = vrot.lane.b32.xlu0 %v1013, 16
        %v2320 = vpop.permute.xlu0 %2319
        %2321 = vrot.lane.b32.xlu0 %v1018, 16
        %v2322 = vpop.permute.xlu0 %2321
        %2323 = vrot.lane.b32.xlu0 %v1023, 16
        %v2324 = vpop.permute.xlu0 %2323
        %2325 = vrot.lane.b32.xlu0 %v1028, 16
        %v2326 = vpop.permute.xlu0 %2325
        %2335 = vrot.lane.b32.xlu0 %v1227, 32
        %v2336 = vpop.permute.xlu0 %2335
        %2337 = vrot.lane.b32.xlu0 %v1232, 32
        %v2338 = vpop.permute.xlu0 %2337
        %2339 = vrot.lane.b32.xlu0 %v1237, 32
        %v2340 = vpop.permute.xlu0 %2339
        %2341 = vrot.lane.b32.xlu0 %v1242, 32
        %v2342 = vpop.permute.xlu0 %2341
        %2351 = vrot.lane.b32.xlu0 %v1441, 48
        %v2352 = vpop.permute.xlu0 %2351
        %2353 = vrot.lane.b32.xlu0 %v1446, 48
        %v2354 = vpop.permute.xlu0 %2353
        %2355 = vrot.lane.b32.xlu0 %v1451, 48
        %v2356 = vpop.permute.xlu0 %2355
        %2357 = vrot.lane.b32.xlu0 %v1456, 48
        %v2358 = vpop.permute.xlu0 %2357
        %2367 = vrot.lane.b32.xlu0 %v1655, 64
        %v2368 = vpop.permute.xlu0 %2367
        %2369 = vrot.lane.b32.xlu0 %v1660, 64
        %v2370 = vpop.permute.xlu0 %2369
        %2371 = vrot.lane.b32.xlu0 %v1665, 64
        %v2372 = vpop.permute.xlu0 %2371
        %2373 = vrot.lane.b32.xlu0 %v1670, 64
        %v2374 = vpop.permute.xlu0 %2373
        %2383 = vrot.lane.b32.xlu0 %v1869, 80
        %v2384 = vpop.permute.xlu0 %2383
        %2385 = vrot.lane.b32.xlu0 %v1874, 80
        %v2386 = vpop.permute.xlu0 %2385
        %2387 = vrot.lane.b32.xlu0 %v1879, 80
        %v2388 = vpop.permute.xlu0 %2387
        %2389 = vrot.lane.b32.xlu0 %v1884, 80
        %v2390 = vpop.permute.xlu0 %2389
        %2399 = vrot.lane.b32.xlu0 %v2083, 96
        %v2400 = vpop.permute.xlu0 %2399
        %2401 = vrot.lane.b32.xlu0 %v2088, 96
        %v2402 = vpop.permute.xlu0 %2401
        %2403 = vrot.lane.b32.xlu0 %v2093, 96
        %v2404 = vpop.permute.xlu0 %2403
        %2405 = vrot.lane.b32.xlu0 %v2098, 96
        %v2406 = vpop.permute.xlu0 %2405
        %2415 = vrot.lane.b32.xlu0 %v2297, 112
        %v2416 = vpop.permute.xlu0 %2415
        %2417 = vrot.lane.b32.xlu0 %v2302, 112
        %v2418 = vpop.permute.xlu0 %2417
        %2419 = vrot.lane.b32.xlu0 %v2307, 112
        %v2420 = vpop.permute.xlu0 %2419
        %2421 = vrot.lane.b32.xlu0 %v2312, 112
        %v2422 = vpop.permute.xlu0 %2421
        %v2427 = vsel %vm691, %v799, %v2320
        %v2428 = vsel %vm691, %v804, %v2322
        %v2429 = vsel %vm691, %v809, %v2324
        %v2430 = vsel %vm691, %v814, %v2326
        %v2431 = vsel %vm386, %v2427, %v2336
        %v2432 = vsel %vm386, %v2428, %v2338
        %v2433 = vsel %vm386, %v2429, %v2340
        %v2434 = vsel %vm386, %v2430, %v2342
        %vm2435 = vcmask 392192
        %v2436 = vsel %vm2435, %v2431, %v2352
        %v2437 = vsel %vm2435, %v2432, %v2354
        %v2438 = vsel %vm2435, %v2433, %v2356
        %v2439 = vsel %vm2435, %v2434, %v2358
        %vm2440 = vcmask 523264
        %v2441 = vsel %vm2440, %v2436, %v2368
        %v2442 = vsel %vm2440, %v2437, %v2370
        %v2443 = vsel %vm2440, %v2438, %v2372
        %v2444 = vsel %vm2440, %v2439, %v2374
        %vm2445 = vcmask 654336
        %v2446 = vsel %vm2445, %v2441, %v2384
        %v2447 = vsel %vm2445, %v2442, %v2386
        %v2448 = vsel %vm2445, %v2443, %v2388
        %v2449 = vsel %vm2445, %v2444, %v2390
        %vm2450 = vcmask 785408
        %v2451 = vsel %vm2450, %v2446, %v2400
        %v2452 = vsel %vm2450, %v2447, %v2402
        %v2453 = vsel %vm2450, %v2448, %v2404
        %v2454 = vsel %vm2450, %v2449, %v2406
        %vm2455 = vcmask 916480
        %v2456 = vsel %vm2455, %v2451, %v2416
        %v2457 = vsel %vm2455, %v2452, %v2418
        %v2458 = vsel %vm2455, %v2453, %v2420
        %v2459 = vsel %vm2455, %v2454, %v2422
        %s2460 = sld [smem:[#allocation2]]
        %v2461 = vstv %s2460
        %v2462 = vmul.f32 %v2461, %v2456
        %v2463 = vmul.f32 %v2461, %v2457
        %v2464 = vmul.f32 %v2461, %v2458
        %v2465 = vmul.f32 %v2461, %v2459
        %v2466 = vadd.f32 %v2462, %v363
        %v2467 = vadd.f32 %v2463, %v364
        %v2468 = vadd.f32 %v2464, %v365
        %v2469 = vadd.f32 %v2465, %v366
        %2470 = vst [vmem:[%s357] sm:$0xff] %v2466
        %2471 = vst [vmem:[%s357 + $0x8] sm:$0xff] %v2467
        %2472 = vst [vmem:[%s357 + $0x10] sm:$0xff] %v2468
        %2473 = vst [vmem:[%s357 + $0x18] sm:$0xff] %v2469
        %s2474 = sand.u32 %s204, 1
        %s2475 = scalar_lea.sflag [#allocation5], %s2474
        %s2476 = sand.u32 %s204, 1
        %s2477 = smul.addr %s2476, 32
        %s2478 = scalar_lea.vmem [#allocation4], %s2477
        // Predicated region
        $region94: #{tpu_custom_call.1} parent=88 // pred_check
          %p2479 = pneg %p214
        $region95: #{tpu_custom_call.1} parent=88 // pred_check_branch
          %2481 = sbr.rel (%p2479) target = $region97
        $region96: #{tpu_custom_call.1} parent=88 // pred_region
          %s2483 = ssub.s32 512, 512
          %2484 = vsyncadd %s2475, %s2483
          %s2485 = smul.addr %s23, 128
          %s2486 = scalar_lea.hbm %s8, %s2485
          %s2487 = sshll.u32 %s2478, 4
          %s2488 = int_to_ptr.vmem [resolvable:$true] %s2487
          %2493 = dma.vmem_to_hbm [thread:$0]  %s2488, 512, %s2486, %s2475, 128, 256, 8
        $region97: #{tpu_custom_call.1} parent=88 // pred_fallthru
          _
      $region89: #{tpu_custom_call.1} parent=5 // pred_fallthru
        _
      %p2494 = scmp.le.s32.totalorder 2, %s18
      // Predicated region
      $region98: #{tpu_custom_call.1} parent=5 // pred_check
        %p2495 = pneg %p2494
      $region99: #{tpu_custom_call.1} parent=5 // pred_check_branch
        %2497 = sbr.rel (%p2495) target = $region101
      $region100: #{tpu_custom_call.1} parent=5 // pred_region
        %s2498 = ssub.s32 %s18, 2
        // Predicated region
        $region102: #{tpu_custom_call.1} parent=100 // pred_check
          %p2499 = pneg %p220
        $region103: #{tpu_custom_call.1} parent=100 // pred_check_branch
          %2501 = sbr.rel (%p2499) target = $region105
        $region104: #{tpu_custom_call.1} parent=100 // pred_region
          %s2502 = sand.u32 %s205, 1
          %s2503 = scalar_lea.sflag [#allocation5], %s2502
          %s2504 = sand.u32 %s205, 1
          %s2505 = smul.addr %s2504, 32
          %s2506 = scalar_lea.vmem [#allocation4], %s2505
          %2507 = dma.done %s2503, 512
        $region105: #{tpu_custom_call.1} parent=100 // pred_fallthru
          _
      $region101: #{tpu_custom_call.1} parent=5 // pred_fallthru
        _
    $region6: #{tpu_custom_call.1} parent=1 // loop_footer
      %s22 = sadd.s32 1, %s18
    $region7: #{tpu_custom_call.1} parent=1 // loop_footer_branch
      %17 = sbr.rel target = $region3
    $region8: #{tpu_custom_call.1} parent=1 // loop_exit
      _
    %2508 = vsyncpa [#allocation5], 1
    %s2509 = scalar_lea.sflag [#allocation5], 1
    %2510 = vsyncpa %s2509, 1

</llo_original>
